<compile_context>
chip_gen: v6e
topology: v6e:2x2x1
jax: 0.10.0
libtpu: 0.0.40
codegen_flags: <defaults>
</compile_context>

<pallas_src>
import functools

import numpy as np
import jax
import jax.numpy as jnp
from jax import lax
from jax.experimental import pallas as pl
from jax.experimental.pallas import tpu as pltpu


# ----------------------------------------------------------------------------
# helpers
# ----------------------------------------------------------------------------
def _pick_tile(c, prefs=(256, 128)):
    """Largest preferred tile that divides c, else c itself (single tile)."""
    for t in prefs:
        if c >= t and c % t == 0:
            return t
    return c


def _phase_decompose_nhwc(xp):
    """(N, Hp, Wp, C) -> (N, 2, 2, Hph, Wph, C), xph[n,ph,pw,i,j,c]=xp[n,2i+ph,2j+pw,c].

    Pure layout plumbing in XLA.  The zero padding used to make the phase
    planes uniform is never read by the 3x3 / stride-2 taps below.
    """
    n, hp, wp, c = xp.shape
    hph, wph = (hp + 1) // 2, (wp + 1) // 2
    rows = []
    for ph in range(2):
        cols = []
        for pw in range(2):
            p = xp[:, ph::2, pw::2, :]
            p = jnp.pad(
                p, ((0, 0), (0, hph - p.shape[1]), (0, wph - p.shape[2]), (0, 0))
            )
            cols.append(p)
        rows.append(jnp.stack(cols, axis=1))
    return jnp.stack(rows, axis=1)


# ----------------------------------------------------------------------------
# Pallas kernels
# ----------------------------------------------------------------------------
def _conv3x3_s2_kernel(xph_ref, w_ref, b_ref, o_ref, acc_ref, *, ho, wo):
    # xph_ref: (1, 2, 2, Ho+1, Wo+1, tci)   channels-last phase planes
    # w_ref  : (3, 3, tci, tco)
    # b_ref  : (1, tco)
    # o_ref  : (1, Ho*Wo, tco)              lane-dense output block (Cout on lanes)
    # acc_ref: (Ho*Wo, tco) f32 VMEM scratch accumulator (resident across ci)
    ci = pl.program_id(2)
    tci = w_ref.shape[2]

    @pl.when(ci == 0)
    def _init():
        acc_ref[...] = jnp.zeros_like(acc_ref)

    total = None
    for kh in range(3):
        for kw in range(3):
            ph, dh = kh % 2, kh // 2
            pw, dw = kw % 2, kw // 2
            # x_pad[2i+kh, 2j+kw] == phase(kh%2, kw%2) shifted by (kh//2, kw//2);
            # the shift touches only sublane / untiled dims (channels stay on lanes).
            patch = xph_ref[0, ph, pw, dh:dh + ho, dw:dw + wo, :]   # (Ho, Wo, tci)
            patch = patch.reshape(ho * wo, tci)
            contrib = jnp.dot(patch, w_ref[kh, kw],
                              preferred_element_type=jnp.float32)    # (Ho*Wo, tco)
            total = contrib if total is None else total + contrib
    acc_ref[...] += total

    @pl.when(ci == pl.num_programs(2) - 1)
    def _finalize():
        o_ref[0] = (acc_ref[...] + b_ref[...]).astype(o_ref.dtype)


def _avgpool2x2_kernel(x_ref, o_ref, *, w, wo):
    # x_ref: (1, tc, Ho, 2*W) — free reshape of NCHW x, row-pair folded into lanes
    # o_ref: (1, tc, Ho, Wo)
    v = x_ref[0]                                      # (tc, Ho, 2W)
    rs = v[..., :w] + v[..., w:]                      # row-pair sum, lane slices
    tc, ho = rs.shape[0], rs.shape[1]
    # Column-pair sum + 0.25 scale folded into one small constant matmul (MXU),
    # avoiding any strided lane select.
    src = lax.broadcasted_iota(jnp.int32, (w, wo), 0) // 2
    dst = lax.broadcasted_iota(jnp.int32, (w, wo), 1)
    p = jnp.where(src == dst, 0.25, 0.0).astype(rs.dtype)   # (W, Wo)
    y = jnp.dot(rs.reshape(tc * ho, w), p,
                preferred_element_type=jnp.float32)          # (tc*Ho, Wo)
    o_ref[0] = y.reshape(tc, ho, wo).astype(o_ref.dtype)


# ----------------------------------------------------------------------------
# wrappers calling pallas_call
# ----------------------------------------------------------------------------
def downsample_conv(x, w, b, *, padding=1):
    """Conv2d(Cin, Cout, kernel=3, stride=2, padding=padding) on NCHW input."""
    n, cin, h, wsp = x.shape
    cout = w.shape[0]
    hp, wp = h + 2 * padding, wsp + 2 * padding
    ho = (hp - 3) // 2 + 1
    wo = (wp - 3) // 2 + 1

    # layout plumbing (plain XLA): channels-last, pad, phase-decompose
    x_nhwc = jnp.transpose(x, (0, 2, 3, 1))
    xp = jnp.pad(x_nhwc, ((0, 0), (padding, padding), (padding, padding), (0, 0)))
    xph = _phase_decompose_nhwc(xp)                # (N, 2, 2, Ho+1, Wo+1, Cin)
    hph, wph = xph.shape[3], xph.shape[4]

    w_t = jnp.transpose(w, (2, 3, 1, 0))           # (3, 3, Cin, Cout)
    b2 = b.reshape(1, cout)

    tco = _pick_tile(cout)
    tci = _pick_tile(cin)
    n_co = cout // tco
    n_ci = cin // tci

    kernel = functools.partial(_conv3x3_s2_kernel, ho=ho, wo=wo)
    out = pl.pallas_call(
        kernel,
        out_shape=jax.ShapeDtypeStruct((n, ho * wo, cout), x.dtype),
        grid=(n, n_co, n_ci),
        in_specs=[
            pl.BlockSpec((1, 2, 2, hph, wph, tci),
                         lambda ni, co, ci: (ni, 0, 0, 0, 0, ci)),
            pl.BlockSpec((3, 3, tci, tco), lambda ni, co, ci: (0, 0, ci, co)),
            pl.BlockSpec((1, tco), lambda ni, co, ci: (0, co)),
        ],
        out_specs=pl.BlockSpec((1, ho * wo, tco), lambda ni, co, ci: (ni, 0, co)),
        scratch_shapes=[pltpu.VMEM((ho * wo, tco), jnp.float32)],
        compiler_params=pltpu.CompilerParams(
            dimension_semantics=("parallel", "parallel", "arbitrary"),
            vmem_limit_bytes=48 * 1024 * 1024,
        ),
    )(xph, w_t, b2)

    # lane-dense (N, Ho*Wo, Cout) back to NCHW (layout plumbing)
    return jnp.transpose(out.reshape(n, ho, wo, cout), (0, 3, 1, 2))


def downsample_avgpool(x):
    """AvgPool2d(kernel_size=2, stride=2) on NCHW input (H, W even)."""
    n, c, h, wsp = x.shape
    assert h % 2 == 0 and wsp % 2 == 0
    ho, wo = h // 2, wsp // 2

    # Free (row-major contiguous) reshape: fold the H row-pair into the minor dim.
    x2 = x.reshape(n, c, ho, 2 * wsp)

    tc = _pick_tile(c, prefs=(128, 64, 32, 16, 8, 4, 2))
    n_c = c // tc

    kernel = functools.partial(_avgpool2x2_kernel, w=wsp, wo=wo)
    return pl.pallas_call(
        kernel,
        out_shape=jax.ShapeDtypeStruct((n, c, ho, wo), x.dtype),
        grid=(n, n_c),
        in_specs=[
            pl.BlockSpec((1, tc, ho, 2 * wsp), lambda i, j: (i, j, 0, 0)),
        ],
        out_specs=pl.BlockSpec((1, tc, ho, wo), lambda i, j: (i, j, 0, 0)),
        compiler_params=pltpu.CompilerParams(
            dimension_semantics=("parallel", "parallel"),
            vmem_limit_bytes=48 * 1024 * 1024,
        ),
    )(x2)


class Downsample:
    """JAX/Pallas equivalent of the PyTorch Downsample module (dims=2)."""

    def __init__(self, channels, use_conv, dims=2, out_channels=None, padding=1,
                 *, key=None):
        assert dims == 2  # TODO(synk): dims=1/3 paths not implemented
        self.channels = channels
        self.out_channels = out_channels or channels
        self.use_conv = use_conv
        self.padding = padding
        if use_conv:
            assert key is not None
            kw, kb = jax.random.split(key)
            fan_in = channels * 3 * 3
            bound = 1.0 / np.sqrt(fan_in)      # PyTorch Conv2d default init range
            self.w = jax.random.uniform(
                kw, (self.out_channels, channels, 3, 3), jnp.float32, -bound, bound)
            self.b = jax.random.uniform(
                kb, (self.out_channels,), jnp.float32, -bound, bound)
        else:
            assert self.channels == self.out_channels
            self.w = None
            self.b = None

    def __call__(self, x):
        assert x.shape[1] == self.channels
        if self.use_conv:
            return downsample_conv(x, self.w, self.b, padding=self.padding)
        return downsample_avgpool(x)


# ----------------------------------------------------------------------------
# main
# ----------------------------------------------------------------------------
if __name__ == "__main__":
    key = jax.random.PRNGKey(0)
    kx, kparams = jax.random.split(key)

    N, C, H, W = 2, 4, 16, 16
    x = jax.random.normal(kx, (N, C, H, W), jnp.float32)

    # --- use_conv=True path (Conv2d 3x3, stride 2, pad 1, Cout=8) ---
    down_conv = Downsample(channels=C, use_conv=True, dims=2, out_channels=8,
                           padding=1, key=kparams)
    y_conv = down_conv(x)
    jax.block_until_ready(y_conv)

    ref_conv = lax.conv_general_dilated(
        x, down_conv.w, window_strides=(2, 2), padding=((1, 1), (1, 1)),
        dimension_numbers=("NCHW", "OIHW", "NCHW"),
    ) + down_conv.b[None, :, None, None]
    np.testing.assert_allclose(np.asarray(y_conv), np.asarray(ref_conv),
                               atol=1e-4, rtol=1e-4)
    assert y_conv.shape == (N, 8, H // 2, W // 2)

    # --- use_conv=False path (AvgPool2d 2x2, stride 2) ---
    down_pool = Downsample(channels=C, use_conv=False, dims=2)
    y_pool = down_pool(x)
    jax.block_until_ready(y_pool)

    ref_pool = x.reshape(N, C, H // 2, 2, W // 2, 2).mean(axis=(3, 5))
    np.testing.assert_allclose(np.asarray(y_pool), np.asarray(ref_pool),
                               atol=1e-5, rtol=1e-5)
    assert y_pool.shape == (N, C, H // 2, W // 2)

    print("KERNEL_OK")
</pallas_src>

<mosaic_0001>
module attributes {stable_mosaic.version = 11 : i64} {
  func.func @_conv3x3_s2_kernel(%arg0: i32, %arg1: i32, %arg2: i32, %arg3: memref<1x2x2x9x9x4xf32, #tpu.memory_space<vmem>>, %arg4: memref<3x3x4x8xf32, #tpu.memory_space<vmem>>, %arg5: memref<1x8xf32, #tpu.memory_space<vmem>>, %arg6: memref<1x64x8xf32, #tpu.memory_space<vmem>>, %arg7: memref<64x8xf32, #tpu.memory_space<vmem>>) attributes {dimension_semantics = [#tpu.dimension_semantics<parallel>, #tpu.dimension_semantics<parallel>, #tpu.dimension_semantics<arbitrary>], iteration_bounds = array<i64: 2, 1, 1>, scalar_prefetch = 0 : i64, scratch_operands = 1 : i64, tpu.core_type = #tpu.core_type<tc>, window_params = [{transform_indices = @transform_0, window_bounds = array<i64: 1, 2, 2, 9, 9, 4>}, {transform_indices = @transform_1, window_bounds = array<i64: 3, 3, 4, 8>}, {transform_indices = @transform_2, window_bounds = array<i64: 1, 8>}, {transform_indices = @transform_3, window_bounds = array<i64: 1, 64, 8>}]} {
    %c0_i32 = arith.constant 0 : i32
    %0 = arith.cmpi eq, %arg2, %c0_i32 : i32
    %1 = arith.extui %0 : i1 to i32
    %c0_i32_0 = arith.constant 0 : i32
    %2 = arith.cmpi ne, %1, %c0_i32_0 : i32
    scf.if %2 {
      %cst_102 = arith.constant 0.000000e+00 : f32
      %71 = vector.broadcast %cst_102 : f32 to vector<64x8xf32>
      %c0_103 = arith.constant 0 : index
      %c0_104 = arith.constant 0 : index
      %72 = vector.load %arg7[%c0_103, %c0_104] : memref<64x8xf32, #tpu.memory_space<vmem>>, vector<64x8xf32>
      tpu.vector_store %arg7[%c0_103, %c0_104], %71 {strides = array<i32>} : memref<64x8xf32, #tpu.memory_space<vmem>>, vector<64x8xf32>,
    } else {
    }
    %c0 = arith.constant 0 : index
    %c0_1 = arith.constant 0 : index
    %c0_2 = arith.constant 0 : index
    %c0_3 = arith.constant 0 : index
    %c0_4 = arith.constant 0 : index
    %c0_5 = arith.constant 0 : index
    %3 = vector.load %arg3[%c0, %c0_1, %c0_2, %c0_3, %c0_4, %c0_5] : memref<1x2x2x9x9x4xf32, #tpu.memory_space<vmem>>, vector<1x1x1x8x8x4xf32>
    %4 = vector.shape_cast %3 : vector<1x1x1x8x8x4xf32> to vector<8x8x4xf32>
    %5 = vector.shape_cast %4 : vector<8x8x4xf32> to vector<64x4xf32>
    %c0_6 = arith.constant 0 : index
    %c0_7 = arith.constant 0 : index
    %c0_8 = arith.constant 0 : index
    %c0_9 = arith.constant 0 : index
    %6 = vector.load %arg4[%c0_6, %c0_7, %c0_8, %c0_9] : memref<3x3x4x8xf32, #tpu.memory_space<vmem>>, vector<1x1x4x8xf32>
    %7 = vector.shape_cast %6 : vector<1x1x4x8xf32> to vector<4x8xf32>
    %cst = arith.constant dense<0.000000e+00> : vector<64x8xf32>
    %8 = tpu.matmul %5, %7, %cst {dimension_numbers = #tpu.dot_dimension_numbers<[1], [0], [0], [1], [0, 0, 1, 1], [], []>} : vector<64x4xf32>, vector<4x8xf32>, vector<64x8xf32> -> vector<64x8xf32>
    %c0_10 = arith.constant 0 : index
    %c0_11 = arith.constant 0 : index
    %c1 = arith.constant 1 : index
    %c0_12 = arith.constant 0 : index
    %c0_13 = arith.constant 0 : index
    %c0_14 = arith.constant 0 : index
    %9 = vector.load %arg3[%c0_10, %c0_11, %c1, %c0_12, %c0_13, %c0_14] : memref<1x2x2x9x9x4xf32, #tpu.memory_space<vmem>>, vector<1x1x1x8x8x4xf32>
    %10 = vector.shape_cast %9 : vector<1x1x1x8x8x4xf32> to vector<8x8x4xf32>
    %11 = vector.shape_cast %10 : vector<8x8x4xf32> to vector<64x4xf32>
    %c0_15 = arith.constant 0 : index
    %c1_16 = arith.constant 1 : index
    %c0_17 = arith.constant 0 : index
    %c0_18 = arith.constant 0 : index
    %12 = vector.load %arg4[%c0_15, %c1_16, %c0_17, %c0_18] : memref<3x3x4x8xf32, #tpu.memory_space<vmem>>, vector<1x1x4x8xf32>
    %13 = vector.shape_cast %12 : vector<1x1x4x8xf32> to vector<4x8xf32>
    %cst_19 = arith.constant dense<0.000000e+00> : vector<64x8xf32>
    %14 = tpu.matmul %11, %13, %cst_19 {dimension_numbers = #tpu.dot_dimension_numbers<[1], [0], [0], [1], [0, 0, 1, 1], [], []>} : vector<64x4xf32>, vector<4x8xf32>, vector<64x8xf32> -> vector<64x8xf32>
    %15 = arith.addf %8, %14 : vector<64x8xf32>
    %c0_20 = arith.constant 0 : index
    %c0_21 = arith.constant 0 : index
    %c0_22 = arith.constant 0 : index
    %c0_23 = arith.constant 0 : index
    %c1_24 = arith.constant 1 : index
    %c0_25 = arith.constant 0 : index
    %16 = vector.load %arg3[%c0_20, %c0_21, %c0_22, %c0_23, %c1_24, %c0_25] : memref<1x2x2x9x9x4xf32, #tpu.memory_space<vmem>>, vector<1x1x1x8x8x4xf32>
    %17 = vector.shape_cast %16 : vector<1x1x1x8x8x4xf32> to vector<8x8x4xf32>
    %18 = vector.shape_cast %17 : vector<8x8x4xf32> to vector<64x4xf32>
    %c0_26 = arith.constant 0 : index
    %c2 = arith.constant 2 : index
    %c0_27 = arith.constant 0 : index
    %c0_28 = arith.constant 0 : index
    %19 = vector.load %arg4[%c0_26, %c2, %c0_27, %c0_28] : memref<3x3x4x8xf32, #tpu.memory_space<vmem>>, vector<1x1x4x8xf32>
    %20 = vector.shape_cast %19 : vector<1x1x4x8xf32> to vector<4x8xf32>
    %cst_29 = arith.constant dense<0.000000e+00> : vector<64x8xf32>
    %21 = tpu.matmul %18, %20, %cst_29 {dimension_numbers = #tpu.dot_dimension_numbers<[1], [0], [0], [1], [0, 0, 1, 1], [], []>} : vector<64x4xf32>, vector<4x8xf32>, vector<64x8xf32> -> vector<64x8xf32>
    %22 = arith.addf %15, %21 : vector<64x8xf32>
    %c0_30 = arith.constant 0 : index
    %c1_31 = arith.constant 1 : index
    %c0_32 = arith.constant 0 : index
    %c0_33 = arith.constant 0 : index
    %c0_34 = arith.constant 0 : index
    %c0_35 = arith.constant 0 : index
    %23 = vector.load %arg3[%c0_30, %c1_31, %c0_32, %c0_33, %c0_34, %c0_35] : memref<1x2x2x9x9x4xf32, #tpu.memory_space<vmem>>, vector<1x1x1x8x8x4xf32>
    %24 = vector.shape_cast %23 : vector<1x1x1x8x8x4xf32> to vector<8x8x4xf32>
    %25 = vector.shape_cast %24 : vector<8x8x4xf32> to vector<64x4xf32>
    %c1_36 = arith.constant 1 : index
    %c0_37 = arith.constant 0 : index
    %c0_38 = arith.constant 0 : index
    %c0_39 = arith.constant 0 : index
    %26 = vector.load %arg4[%c1_36, %c0_37, %c0_38, %c0_39] : memref<3x3x4x8xf32, #tpu.memory_space<vmem>>, vector<1x1x4x8xf32>
    %27 = vector.shape_cast %26 : vector<1x1x4x8xf32> to vector<4x8xf32>
    %cst_40 = arith.constant dense<0.000000e+00> : vector<64x8xf32>
    %28 = tpu.matmul %25, %27, %cst_40 {dimension_numbers = #tpu.dot_dimension_numbers<[1], [0], [0], [1], [0, 0, 1, 1], [], []>} : vector<64x4xf32>, vector<4x8xf32>, vector<64x8xf32> -> vector<64x8xf32>
    %29 = arith.addf %22, %28 : vector<64x8xf32>
    %c0_41 = arith.constant 0 : index
    %c1_42 = arith.constant 1 : index
    %c1_43 = arith.constant 1 : index
    %c0_44 = arith.constant 0 : index
    %c0_45 = arith.constant 0 : index
    %c0_46 = arith.constant 0 : index
    %30 = vector.load %arg3[%c0_41, %c1_42, %c1_43, %c0_44, %c0_45, %c0_46] : memref<1x2x2x9x9x4xf32, #tpu.memory_space<vmem>>, vector<1x1x1x8x8x4xf32>
    %31 = vector.shape_cast %30 : vector<1x1x1x8x8x4xf32> to vector<8x8x4xf32>
    %32 = vector.shape_cast %31 : vector<8x8x4xf32> to vector<64x4xf32>
    %c1_47 = arith.constant 1 : index
    %c1_48 = arith.constant 1 : index
    %c0_49 = arith.constant 0 : index
    %c0_50 = arith.constant 0 : index
    %33 = vector.load %arg4[%c1_47, %c1_48, %c0_49, %c0_50] : memref<3x3x4x8xf32, #tpu.memory_space<vmem>>, vector<1x1x4x8xf32>
    %34 = vector.shape_cast %33 : vector<1x1x4x8xf32> to vector<4x8xf32>
    %cst_51 = arith.constant dense<0.000000e+00> : vector<64x8xf32>
    %35 = tpu.matmul %32, %34, %cst_51 {dimension_numbers = #tpu.dot_dimension_numbers<[1], [0], [0], [1], [0, 0, 1, 1], [], []>} : vector<64x4xf32>, vector<4x8xf32>, vector<64x8xf32> -> vector<64x8xf32>
    %36 = arith.addf %29, %35 : vector<64x8xf32>
    %c0_52 = arith.constant 0 : index
    %c1_53 = arith.constant 1 : index
    %c0_54 = arith.constant 0 : index
    %c0_55 = arith.constant 0 : index
    %c1_56 = arith.constant 1 : index
    %c0_57 = arith.constant 0 : index
    %37 = vector.load %arg3[%c0_52, %c1_53, %c0_54, %c0_55, %c1_56, %c0_57] : memref<1x2x2x9x9x4xf32, #tpu.memory_space<vmem>>, vector<1x1x1x8x8x4xf32>
    %38 = vector.shape_cast %37 : vector<1x1x1x8x8x4xf32> to vector<8x8x4xf32>
    %39 = vector.shape_cast %38 : vector<8x8x4xf32> to vector<64x4xf32>
    %c1_58 = arith.constant 1 : index
    %c2_59 = arith.constant 2 : index
    %c0_60 = arith.constant 0 : index
    %c0_61 = arith.constant 0 : index
    %40 = vector.load %arg4[%c1_58, %c2_59, %c0_60, %c0_61] : memref<3x3x4x8xf32, #tpu.memory_space<vmem>>, vector<1x1x4x8xf32>
    %41 = vector.shape_cast %40 : vector<1x1x4x8xf32> to vector<4x8xf32>
    %cst_62 = arith.constant dense<0.000000e+00> : vector<64x8xf32>
    %42 = tpu.matmul %39, %41, %cst_62 {dimension_numbers = #tpu.dot_dimension_numbers<[1], [0], [0], [1], [0, 0, 1, 1], [], []>} : vector<64x4xf32>, vector<4x8xf32>, vector<64x8xf32> -> vector<64x8xf32>
    %43 = arith.addf %36, %42 : vector<64x8xf32>
    %c0_63 = arith.constant 0 : index
    %c0_64 = arith.constant 0 : index
    %c0_65 = arith.constant 0 : index
    %c1_66 = arith.constant 1 : index
    %c0_67 = arith.constant 0 : index
    %c0_68 = arith.constant 0 : index
    %44 = vector.load %arg3[%c0_63, %c0_64, %c0_65, %c1_66, %c0_67, %c0_68] : memref<1x2x2x9x9x4xf32, #tpu.memory_space<vmem>>, vector<1x1x1x8x8x4xf32>
    %45 = vector.shape_cast %44 : vector<1x1x1x8x8x4xf32> to vector<8x8x4xf32>
    %46 = vector.shape_cast %45 : vector<8x8x4xf32> to vector<64x4xf32>
    %c2_69 = arith.constant 2 : index
    %c0_70 = arith.constant 0 : index
    %c0_71 = arith.constant 0 : index
    %c0_72 = arith.constant 0 : index
    %47 = vector.load %arg4[%c2_69, %c0_70, %c0_71, %c0_72] : memref<3x3x4x8xf32, #tpu.memory_space<vmem>>, vector<1x1x4x8xf32>
    %48 = vector.shape_cast %47 : vector<1x1x4x8xf32> to vector<4x8xf32>
    %cst_73 = arith.constant dense<0.000000e+00> : vector<64x8xf32>
    %49 = tpu.matmul %46, %48, %cst_73 {dimension_numbers = #tpu.dot_dimension_numbers<[1], [0], [0], [1], [0, 0, 1, 1], [], []>} : vector<64x4xf32>, vector<4x8xf32>, vector<64x8xf32> -> vector<64x8xf32>
    %50 = arith.addf %43, %49 : vector<64x8xf32>
    %c0_74 = arith.constant 0 : index
    %c0_75 = arith.constant 0 : index
    %c1_76 = arith.constant 1 : index
    %c1_77 = arith.constant 1 : index
    %c0_78 = arith.constant 0 : index
    %c0_79 = arith.constant 0 : index
    %51 = vector.load %arg3[%c0_74, %c0_75, %c1_76, %c1_77, %c0_78, %c0_79] : memref<1x2x2x9x9x4xf32, #tpu.memory_space<vmem>>, vector<1x1x1x8x8x4xf32>
    %52 = vector.shape_cast %51 : vector<1x1x1x8x8x4xf32> to vector<8x8x4xf32>
    %53 = vector.shape_cast %52 : vector<8x8x4xf32> to vector<64x4xf32>
    %c2_80 = arith.constant 2 : index
    %c1_81 = arith.constant 1 : index
    %c0_82 = arith.constant 0 : index
    %c0_83 = arith.constant 0 : index
    %54 = vector.load %arg4[%c2_80, %c1_81, %c0_82, %c0_83] : memref<3x3x4x8xf32, #tpu.memory_space<vmem>>, vector<1x1x4x8xf32>
    %55 = vector.shape_cast %54 : vector<1x1x4x8xf32> to vector<4x8xf32>
    %cst_84 = arith.constant dense<0.000000e+00> : vector<64x8xf32>
    %56 = tpu.matmul %53, %55, %cst_84 {dimension_numbers = #tpu.dot_dimension_numbers<[1], [0], [0], [1], [0, 0, 1, 1], [], []>} : vector<64x4xf32>, vector<4x8xf32>, vector<64x8xf32> -> vector<64x8xf32>
    %57 = arith.addf %50, %56 : vector<64x8xf32>
    %c0_85 = arith.constant 0 : index
    %c0_86 = arith.constant 0 : index
    %c0_87 = arith.constant 0 : index
    %c1_88 = arith.constant 1 : index
    %c1_89 = arith.constant 1 : index
    %c0_90 = arith.constant 0 : index
    %58 = vector.load %arg3[%c0_85, %c0_86, %c0_87, %c1_88, %c1_89, %c0_90] : memref<1x2x2x9x9x4xf32, #tpu.memory_space<vmem>>, vector<1x1x1x8x8x4xf32>
    %59 = vector.shape_cast %58 : vector<1x1x1x8x8x4xf32> to vector<8x8x4xf32>
    %60 = vector.shape_cast %59 : vector<8x8x4xf32> to vector<64x4xf32>
    %c2_91 = arith.constant 2 : index
    %c2_92 = arith.constant 2 : index
    %c0_93 = arith.constant 0 : index
    %c0_94 = arith.constant 0 : index
    %61 = vector.load %arg4[%c2_91, %c2_92, %c0_93, %c0_94] : memref<3x3x4x8xf32, #tpu.memory_space<vmem>>, vector<1x1x4x8xf32>
    %62 = vector.shape_cast %61 : vector<1x1x4x8xf32> to vector<4x8xf32>
    %cst_95 = arith.constant dense<0.000000e+00> : vector<64x8xf32>
    %63 = tpu.matmul %60, %62, %cst_95 {dimension_numbers = #tpu.dot_dimension_numbers<[1], [0], [0], [1], [0, 0, 1, 1], [], []>} : vector<64x4xf32>, vector<4x8xf32>, vector<64x8xf32> -> vector<64x8xf32>
    %64 = arith.addf %57, %63 : vector<64x8xf32>
    %c0_96 = arith.constant 0 : index
    %c0_97 = arith.constant 0 : index
    %65 = vector.load %arg7[%c0_96, %c0_97] : memref<64x8xf32, #tpu.memory_space<vmem>>, vector<64x8xf32>
    %66 = arith.addf %65, %64 : vector<64x8xf32>
    %c0_98 = arith.constant 0 : index
    %c0_99 = arith.constant 0 : index
    %67 = vector.load %arg7[%c0_98, %c0_99] : memref<64x8xf32, #tpu.memory_space<vmem>>, vector<64x8xf32>
    tpu.vector_store %arg7[%c0_98, %c0_99], %66 {strides = array<i32>} : memref<64x8xf32, #tpu.memory_space<vmem>>, vector<64x8xf32>,
    %c0_i32_100 = arith.constant 0 : i32
    %68 = arith.cmpi eq, %arg2, %c0_i32_100 : i32
    %69 = arith.extui %68 : i1 to i32
    %c0_i32_101 = arith.constant 0 : i32
    %70 = arith.cmpi ne, %69, %c0_i32_101 : i32
    scf.if %70 {
      %c0_102 = arith.constant 0 : index
      %c0_103 = arith.constant 0 : index
      %71 = vector.load %arg7[%c0_102, %c0_103] : memref<64x8xf32, #tpu.memory_space<vmem>>, vector<64x8xf32>
      %c0_104 = arith.constant 0 : index
      %c0_105 = arith.constant 0 : index
      %72 = vector.load %arg5[%c0_104, %c0_105] : memref<1x8xf32, #tpu.memory_space<vmem>>, vector<1x8xf32>
      %73 = vector.broadcast %72 : vector<1x8xf32> to vector<64x8xf32>
      %74 = arith.addf %71, %73 : vector<64x8xf32>
      %c0_106 = arith.constant 0 : index
      %c0_107 = arith.constant 0 : index
      %c0_108 = arith.constant 0 : index
      %75 = vector.load %arg6[%c0_106, %c0_107, %c0_108] : memref<1x64x8xf32, #tpu.memory_space<vmem>>, vector<1x64x8xf32>
      %76 = vector.shape_cast %75 : vector<1x64x8xf32> to vector<64x8xf32>
      %77 = vector.shape_cast %74 : vector<64x8xf32> to vector<1x64x8xf32>
      tpu.vector_store %arg6[%c0_106, %c0_107, %c0_108], %77 {strides = array<i32>} : memref<1x64x8xf32, #tpu.memory_space<vmem>>, vector<1x64x8xf32>,
    } else {
    }
    return
  }
  func.func @transform_0(%arg0: i32, %arg1: i32, %arg2: i32) -> (i32, i32, i32, i32, i32, i32) {
    %c0_i32 = arith.constant 0 : i32
    %c0_i32_0 = arith.constant 0 : i32
    %c0_i32_1 = arith.constant 0 : i32
    %c0_i32_2 = arith.constant 0 : i32
    %c0_i32_3 = arith.constant 0 : i32
    return %arg0, %c0_i32, %c0_i32_0, %c0_i32_1, %c0_i32_2, %arg2 : i32, i32, i32, i32, i32, i32
  }
  func.func @transform_1(%arg0: i32, %arg1: i32, %arg2: i32) -> (i32, i32, i32, i32) {
    %c0_i32 = arith.constant 0 : i32
    %c0_i32_0 = arith.constant 0 : i32
    %c0_i32_1 = arith.constant 0 : i32
    return %c0_i32, %c0_i32_0, %arg2, %arg1 : i32, i32, i32, i32
  }
  func.func @transform_2(%arg0: i32, %arg1: i32, %arg2: i32) -> (i32, i32) {
    %c0_i32 = arith.constant 0 : i32
    %c0_i32_0 = arith.constant 0 : i32
    return %c0_i32, %arg1 : i32, i32
  }
  func.func @transform_3(%arg0: i32, %arg1: i32, %arg2: i32) -> (i32, i32, i32) {
    %c0_i32 = arith.constant 0 : i32
    %c0_i32_0 = arith.constant 0 : i32
    return %arg0, %c0_i32, %arg1 : i32, i32, i32
  }
}

</mosaic_0001>

<llo_original>
// kernel: tpu_custom_call.1
$region0: #{tpu_custom_call.1}
  #allocation0 [shape = 'u32[]', space=smem, size = 0x4, offset = 0x4, fixed_abs, tag = 'smem constant byte address 0x4 - core index']
  #allocation1 [shape = 'u32[144,128]{1,0:T(1,128)}', space=vmem, size = 0x12000, scoped, tag = 'internal scratch']
  #allocation2 [shape = 'f32[64,8]{1,0:T(8,128)}', space=vmem, size = 0x8000, scoped, tag = 'scratch operand']
  %s0 = inlined_call_operand.vmem [shape: f32[2,2,2,9,9,4], index: 0, kind: input, shape index: {}]
  %s1 = inlined_call_operand.vmem [shape: f32[3,3,4,8], index: 1, kind: input, shape index: {}]
  %s2 = inlined_call_operand.vmem [shape: f32[1,8], index: 2, kind: input, shape index: {}]
  %s3 = inlined_call_operand.vmem [shape: f32[2,64,8], index: 3, kind: output, shape index: {}]
  %s4 = sld [smem:[#allocation0]]
  $region53: #{tpu_custom_call.1} parent=0
    _
  %s6 = ssub.s32 1, %s4
  %s7 = scalar_select 0, %s6, %s4
  loop: start=0, step=1, limit=4
  $region2: #{tpu_custom_call.1} parent=0 // loop_pre_header
    _
  $region3: #{tpu_custom_call.1} parent=0 // loop_header
    %s9 = sphi 0, %s13
    %p10 = scmp.ge.s32.totalorder %s9, 4
    %s16 = sphi 0, %s35
    %s17 = sphi 0, %s31
    %s18 = sphi 0, %s27
    %s19 = sphi 0, %s16
    %s20 = sphi 0, %s17
    %s21 = sphi 0, %s18
    %s22 = sphi 0, %s19
    %s23 = sphi 0, %s20
    %s24 = sphi 0, %s21
    %s40 = sphi 0, %s42
    %s43 = sphi 0, %s40
    %s44 = sphi 0, %s43
    %s60 = sphi 0, %s44
    %s68 = sphi 0, %s70
    %s71 = sphi 0, %s68
    %s72 = sphi 0, %s71
    %s88 = sphi 0, %s72
    %s94 = sphi 0, %s96
    %s97 = sphi 0, %s94
    %s98 = sphi 0, %s97
    %s114 = sphi 0, %s98
    %s122 = sphi 0, %s124
    %s125 = sphi 0, %s122
    %s126 = sphi 0, %s125
    %s142 = sphi 0, %s126
  $region4: #{tpu_custom_call.1} parent=0 // loop_header_branch
    %12 = sbr.rel (%p10) target = $region8
  $region5: #{tpu_custom_call.1} parent=0 // loop_body
    %s14 = ssub.s32 %s9, 1
    %s15 = ssub.s32 %s9, 2
    %s25 = sadd.s32 1, %s18
    %p26 = scmp.ge.s32.totalorder %s25, 1
    %s27 = scalar_select %p26, 0, %s25
    %s28 = sadd.s32 1, %s17
    %s29 = scalar_select %p26, %s28, %s17
    %p30 = scmp.ge.s32.totalorder %s29, 1
    %s31 = scalar_select %p30, 0, %s29
    %s32 = sadd.s32 1, %s16
    %s33 = scalar_select %p30, %s32, %s16
    %p34 = scmp.ge.s32.totalorder %s33, 2
    %s35 = scalar_select %p34, 0, %s33
    %s36 = ssub.s32 %s16, %s35
    %s37 = ssub.s32 %s18, %s27
    %s38 = sor.u32 %s36, %s37
    %p39 = scmp.eq.s32.totalorder %s38, 0
    %s41 = sadd.s32 %s40, 1
    %s42 = scalar_select %p39, %s40, %s41
    %p45 = pneg %p39
    %p46 = scmp.eq.s32.totalorder %s9, 1
    %p47 = por %p45, %p46
    %p48 = scmp.ne.s32.totalorder %s40, %s43
    %p49 = scmp.eq.s32.totalorder %s9, 0
    %p50 = por %p48, %p49
    %p51 = scmp.ne.s32.totalorder %s40, %s43
    %p52 = scmp.eq.s32.totalorder %s14, 1
    %p53 = por %p51, %p52
    %p54 = scmp.ne.s32.totalorder %s43, %s44
    %p55 = scmp.eq.s32.totalorder %s14, 0
    %p56 = por %p54, %p55
    %p57 = scmp.ne.s32.totalorder %s43, %s44
    %p58 = scmp.eq.s32.totalorder %s15, 1
    %p59 = por %p57, %p58
    %p61 = scmp.ne.s32.totalorder %s44, %s60
    %p62 = scmp.eq.s32.totalorder %s15, 0
    %p63 = por %p61, %p62
    %s64 = ssub.s32 %s18, %s27
    %s65 = ssub.s32 %s17, %s31
    %s66 = sor.u32 %s64, %s65
    %p67 = scmp.eq.s32.totalorder %s66, 0
    %s69 = sadd.s32 %s68, 1
    %s70 = scalar_select %p67, %s68, %s69
    %p73 = pneg %p67
    %p74 = scmp.eq.s32.totalorder %s9, 1
    %p75 = por %p73, %p74
    %p76 = scmp.ne.s32.totalorder %s68, %s71
    %p77 = scmp.eq.s32.totalorder %s9, 0
    %p78 = por %p76, %p77
    %p79 = scmp.ne.s32.totalorder %s68, %s71
    %p80 = scmp.eq.s32.totalorder %s14, 1
    %p81 = por %p79, %p80
    %p82 = scmp.ne.s32.totalorder %s71, %s72
    %p83 = scmp.eq.s32.totalorder %s14, 0
    %p84 = por %p82, %p83
    %p85 = scmp.ne.s32.totalorder %s71, %s72
    %p86 = scmp.eq.s32.totalorder %s15, 1
    %p87 = por %p85, %p86
    %p89 = scmp.ne.s32.totalorder %s72, %s88
    %p90 = scmp.eq.s32.totalorder %s15, 0
    %p91 = por %p89, %p90
    %s92 = ssub.s32 %s17, %s31
    %p93 = scmp.eq.s32.totalorder %s92, 0
    %s95 = sadd.s32 %s94, 1
    %s96 = scalar_select %p93, %s94, %s95
    %p99 = pneg %p93
    %p100 = scmp.eq.s32.totalorder %s9, 1
    %p101 = por %p99, %p100
    %p102 = scmp.ne.s32.totalorder %s94, %s97
    %p103 = scmp.eq.s32.totalorder %s9, 0
    %p104 = por %p102, %p103
    %p105 = scmp.ne.s32.totalorder %s94, %s97
    %p106 = scmp.eq.s32.totalorder %s14, 1
    %p107 = por %p105, %p106
    %p108 = scmp.ne.s32.totalorder %s97, %s98
    %p109 = scmp.eq.s32.totalorder %s14, 0
    %p110 = por %p108, %p109
    %p111 = scmp.ne.s32.totalorder %s97, %s98
    %p112 = scmp.eq.s32.totalorder %s15, 1
    %p113 = por %p111, %p112
    %p115 = scmp.ne.s32.totalorder %s98, %s114
    %p116 = scmp.eq.s32.totalorder %s15, 0
    %p117 = por %p115, %p116
    %s118 = ssub.s32 %s16, %s35
    %s119 = ssub.s32 %s17, %s31
    %s120 = sor.u32 %s118, %s119
    %p121 = scmp.eq.s32.totalorder %s120, 0
    %s123 = sadd.s32 %s122, 1
    %s124 = scalar_select %p121, %s122, %s123
    %p127 = pneg %p121
    %p128 = scmp.eq.s32.totalorder %s9, 1
    %p129 = por %p127, %p128
    %p130 = scmp.ne.s32.totalorder %s122, %s125
    %p131 = scmp.eq.s32.totalorder %s9, 0
    %p132 = por %p130, %p131
    %p133 = scmp.ne.s32.totalorder %s122, %s125
    %p134 = scmp.eq.s32.totalorder %s14, 1
    %p135 = por %p133, %p134
    %p136 = scmp.ne.s32.totalorder %s125, %s126
    %p137 = scmp.eq.s32.totalorder %s14, 0
    %p138 = por %p136, %p137
    %p139 = scmp.ne.s32.totalorder %s125, %s126
    %p140 = scmp.eq.s32.totalorder %s15, 1
    %p141 = por %p139, %p140
    %p143 = scmp.ne.s32.totalorder %s126, %s142
    %p144 = scmp.eq.s32.totalorder %s15, 0
    %p145 = por %p143, %p144
    %p146 = scmp.le.s32.totalorder 1, %s9
    %p147 = scmp.lt.s32.totalorder %s9, 3
    %p148 = pnand %p146, %p147
    %p149 = pneg %p148
    // Predicated region
    $region9: #{tpu_custom_call.1} parent=5 // pred_check
      _
    $region10: #{tpu_custom_call.1} parent=5 // pred_check_branch
      %151 = sbr.rel (%p148) target = $region12
    $region11: #{tpu_custom_call.1} parent=5 // pred_region
      %s152 = ssub.s32 %s9, 1
      // Predicated region
      $region13: #{tpu_custom_call.1} parent=11 // pred_check
        %p153 = pneg %p84
      $region14: #{tpu_custom_call.1} parent=11 // pred_check_branch
        %155 = sbr.rel (%p153) target = $region16
      $region15: #{tpu_custom_call.1} parent=11 // pred_region
        %p156 = scmp.lt.s32.totalorder %s21, 0
        %s157 = scalar_select %p156, %s21, 0
        %p158 = scmp.lt.s32.totalorder %s20, 0
        %s159 = scalar_select %p158, %s20, 0
        %s160 = sadd.s32 %s159, %s157
        %s161 = smul.addr %s160, 4
        %s162 = scalar_lea.vmem %s1, %s161
      $region16: #{tpu_custom_call.1} parent=11 // pred_fallthru
        _
      // Predicated region
      $region17: #{tpu_custom_call.1} parent=11 // pred_check
        %p163 = pneg %p110
      $region18: #{tpu_custom_call.1} parent=11 // pred_check_branch
        %165 = sbr.rel (%p163) target = $region20
      $region19: #{tpu_custom_call.1} parent=11 // pred_region
        %p166 = scmp.lt.s32.totalorder %s20, 0
        %s167 = scalar_select %p166, %s20, 0
        %s168 = scalar_lea.vmem %s2, %s167
      $region20: #{tpu_custom_call.1} parent=11 // pred_fallthru
        _
    $region12: #{tpu_custom_call.1} parent=5 // pred_fallthru
      _
    %p169 = scmp.lt.s32.totalorder %s9, 2
    // Predicated region
    $region21: #{tpu_custom_call.1} parent=5 // pred_check
      %p170 = pneg %p169
    $region22: #{tpu_custom_call.1} parent=5 // pred_check_branch
      %172 = sbr.rel (%p170) target = $region24
    $region23: #{tpu_custom_call.1} parent=5 // pred_region
      // Predicated region
      $region25: #{tpu_custom_call.1} parent=23 // pred_check
        %p173 = pneg %p50
      $region26: #{tpu_custom_call.1} parent=23 // pred_check_branch
        %175 = sbr.rel (%p173) target = $region28
      $region27: #{tpu_custom_call.1} parent=23 // pred_region
        %p176 = scmp.lt.s32.totalorder %s16, 1
        %s177 = scalar_select %p176, %s16, 1
        %p178 = scmp.lt.s32.totalorder %s18, 0
        %s179 = scalar_select %p178, %s18, 0
        %s180 = smul.addr %s177, 72
        %s181 = sadd.s32 %s179, %s180
        %s182 = smul.addr %s181, 8
        %s183 = scalar_lea.vmem %s0, %s182
      $region28: #{tpu_custom_call.1} parent=23 // pred_fallthru
        _
    $region24: #{tpu_custom_call.1} parent=5 // pred_fallthru
      _
    %p184 = scmp.le.s32.totalorder 1, %s9
    %p185 = scmp.lt.s32.totalorder %s9, 3
    %p186 = pnand %p184, %p185
    %p187 = pneg %p186
    // Predicated region
    $region29: #{tpu_custom_call.1} parent=5 // pred_check
      _
    $region30: #{tpu_custom_call.1} parent=5 // pred_check_branch
      %189 = sbr.rel (%p186) target = $region32
    $region31: #{tpu_custom_call.1} parent=5 // pred_region
      %s190 = ssub.s32 %s9, 1
      %p191 = scmp.lt.s32.totalorder %s19, 1
      %s192 = scalar_select %p191, %s19, 1
      %p193 = scmp.lt.s32.totalorder %s21, 0
      %s194 = scalar_select %p193, %s21, 0
      %s195 = smul.addr %s192, 72
      %s196 = sadd.s32 %s194, %s195
      %s197 = smul.addr %s196, 8
      %s198 = scalar_lea.vmem %s0, %s197
      %p199 = pneg %p56
      %p200 = pneg %p53
      %p201 = scmp.lt.s32.totalorder %s21, 0
      %s202 = scalar_select %p201, %s21, 0
      %p203 = scmp.lt.s32.totalorder %s20, 0
      %s204 = scalar_select %p203, %s20, 0
      %s205 = sadd.s32 %s204, %s202
      %s206 = smul.addr %s205, 4
      %s207 = scalar_lea.vmem %s1, %s206
      %p208 = pneg %p84
      %p209 = pneg %p81
      %p210 = scmp.lt.s32.totalorder %s20, 0
      %s211 = scalar_select %p210, %s20, 0
      %s212 = scalar_lea.vmem %s2, %s211
      %p213 = pneg %p110
      %p214 = pneg %p107
      %p215 = pneg %p138
      %p216 = pneg %p135
      %p217 = scmp.lt.s32.totalorder %s19, 1
      %s218 = scalar_select %p217, %s19, 1
      %p219 = scmp.lt.s32.totalorder %s20, 0
      %s220 = scalar_select %p219, %s20, 0
      %s221 = smul.addr %s218, 8
      %s222 = sadd.s32 %s220, %s221
      %s223 = smul.addr %s222, 8
      %s224 = scalar_lea.vmem %s3, %s223
      %p225 = scmp.lt.s32.totalorder %s19, 1
      %s226 = scalar_select %p225, %s19, 1
      %p227 = scmp.lt.s32.totalorder %s21, 0
      %s228 = scalar_select %p227, %s21, 0
      %s229 = smul.addr %s226, 72
      %s230 = sadd.s32 %s228, %s229
      %s231 = smul.addr %s230, 8
      %s232 = scalar_lea.vmem %s0, %s231
      %p233 = scmp.lt.s32.totalorder %s21, 0
      %s234 = scalar_select %p233, %s21, 0
      %p235 = scmp.lt.s32.totalorder %s20, 0
      %s236 = scalar_select %p235, %s20, 0
      %s237 = sadd.s32 %s236, %s234
      %s238 = smul.addr %s237, 4
      %s239 = scalar_lea.vmem %s1, %s238
      %p240 = scmp.lt.s32.totalorder %s20, 0
      %s241 = scalar_select %p240, %s20, 0
      %s242 = scalar_lea.vmem %s2, %s241
      %p243 = scmp.lt.s32.totalorder %s19, 1
      %s244 = scalar_select %p243, %s19, 1
      %p245 = scmp.lt.s32.totalorder %s20, 0
      %s246 = scalar_select %p245, %s20, 0
      %s247 = smul.addr %s244, 8
      %s248 = sadd.s32 %s246, %s247
      %s249 = smul.addr %s248, 8
      %s250 = scalar_lea.vmem %s3, %s249
      %p251 = scmp.eq.s32.totalorder %s21, 0
      // Predicated region
      $region33: #{tpu_custom_call.1} parent=31 // pred_check
        %p252 = pneg %p251
      $region34: #{tpu_custom_call.1} parent=31 // pred_check_branch
        %254 = sbr.rel (%p252) target = $region36
      $region35: #{tpu_custom_call.1} parent=31 // pred_region
        %vm255 = vcmask 64512
        %256 = vst.msk [vmem:[#allocation2] sm:$0xff] %vm255, 0.0
        %257 = vst.msk [vmem:[#allocation2 + $0x8] sm:$0xff] %vm255, 0.0
        %258 = vst.msk [vmem:[#allocation2 + $0x10] sm:$0xff] %vm255, 0.0
        %259 = vst.msk [vmem:[#allocation2 + $0x18] sm:$0xff] %vm255, 0.0
        %260 = vst.msk [vmem:[#allocation2 + $0x20] sm:$0xff] %vm255, 0.0
        %261 = vst.msk [vmem:[#allocation2 + $0x28] sm:$0xff] %vm255, 0.0
        %262 = vst.msk [vmem:[#allocation2 + $0x30] sm:$0xff] %vm255, 0.0
        %263 = vst.msk [vmem:[#allocation2 + $0x38] sm:$0xff] %vm255, 0.0
      $region36: #{tpu_custom_call.1} parent=31 // pred_fallthru
        _
      %v264 = vld [vmem:[%s232] sm:$0xff]
      %v265 = vld [vmem:[%s232 + $0x10] sm:$0xff]
      %v266 = vld [vmem:[%s232 + $0x20] sm:$0xff]
      %v267 = vld [vmem:[%s232 + $0x30] sm:$0xff]
      %v268 = vld [vmem:[%s232 + $0x40] sm:$0xff]
      %v269 = vld [vmem:[%s232 + $0x50] sm:$0xff]
      %v270 = vld [vmem:[%s232 + $0x60] sm:$0xff]
      %v271 = vld [vmem:[%s232 + $0x70] sm:$0xff]
      %v272 = vld [vmem:[%s239] sm:$0xf]
      %s273 = scalar_lea.vmem %s232, 144
      %v274 = vld [vmem:[%s273] sm:$0xff]
      %v275 = vld [vmem:[%s273 + $0x10] sm:$0xff]
      %v276 = vld [vmem:[%s273 + $0x20] sm:$0xff]
      %v277 = vld [vmem:[%s273 + $0x30] sm:$0xff]
      %v278 = vld [vmem:[%s273 + $0x40] sm:$0xff]
      %v279 = vld [vmem:[%s273 + $0x50] sm:$0xff]
      %v280 = vld [vmem:[%s273 + $0x60] sm:$0xff]
      %v281 = vld [vmem:[%s273 + $0x70] sm:$0xff]
      %s282 = scalar_lea.vmem %s239, 4
      %v283 = vld [vmem:[%s282] sm:$0xf]
      %vm284 = vcmask 31744
      %v286 = vsel %vm284, %v274, 0
      %v289 = vsel %vm284, %v275, 0
      %v292 = vsel %vm284, %v276, 0
      %v295 = vsel %vm284, %v277, 0
      %v298 = vsel %vm284, %v278, 0
      %v301 = vsel %vm284, %v279, 0
      %v304 = vsel %vm284, %v280, 0
      %v307 = vsel %vm284, %v281, 0
      %vm309 = vcmask 1043456
      %v311 = vsel %vm309, %v283, 0
      %313 = vmatprep.subr.mxu0 0.0
      %314 = vmatpush1.msra.mxu0 0.0
      %315 = vmatprep.subr.mxu0 0.0
      %316 = vmatpush1.msra.mxu0 0.0
      %317 = vmatprep.subr.mxu0 0.0
      %318 = vmatpush1.msra.mxu0 0.0
      %319 = vmatprep.subr.mxu0 0.0
      %320 = vmatpush1.msra.mxu0 0.0
      %321 = vmatprep.subr.mxu0 0.0
      %322 = vmatpush1.msra.mxu0 0.0
      %323 = vmatprep.subr.mxu0 0.0
      %324 = vmatpush1.msra.mxu0 0.0
      %325 = vmatprep.subr.mxu0 0.0
      %326 = vmatpush1.msra.mxu0 0.0
      %327 = vmatprep.subr.mxu0 0.0
      %328 = vmatpush1.msra.mxu0 0.0
      %329 = vmatprep.subr.mxu0 0.0
      %330 = vmatpush1.msra.mxu0 0.0
      %331 = vmatprep.subr.mxu0 0.0
      %332 = vmatpush1.msra.mxu0 0.0
      %333 = vmatprep.subr.mxu0 0.0
      %334 = vmatpush1.msra.mxu0 0.0
      %335 = vmatprep.subr.mxu0 0.0
      %336 = vmatpush1.msra.mxu0 0.0
      %337 = vmatprep.subr.mxu0 0.0
      %338 = vmatpush1.msra.mxu0 0.0
      %339 = vmatprep.subr.mxu0 0.0
      %340 = vmatpush1.msra.mxu0 0.0
      %341 = vmatprep.subr.mxu0 0.0
      %342 = vmatpush1.msra.mxu0 0.0
      %343 = vmatprep.subr.mxu0 0.0
      %344 = vmatpush1.msra.mxu0 %v311
      %345 = vmatprep.subr.mxu0 0.0
      %346 = vmatpush2.msra.mxu0 0.0
      %347 = vmatprep.subr.mxu0 0.0
      %348 = vmatpush2.msra.mxu0 0.0
      %349 = vmatprep.subr.mxu0 0.0
      %350 = vmatpush2.msra.mxu0 0.0
      %351 = vmatprep.subr.mxu0 0.0
      %352 = vmatpush2.msra.mxu0 0.0
      %353 = vmatprep.subr.mxu0 0.0
      %354 = vmatpush2.msra.mxu0 0.0
      %355 = vmatprep.subr.mxu0 0.0
      %356 = vmatpush2.msra.mxu0 0.0
      %357 = vmatprep.subr.mxu0 0.0
      %358 = vmatpush2.msra.mxu0 0.0
      %359 = vmatprep.subr.mxu0 0.0
      %360 = vmatpush2.msra.mxu0 0.0
      %361 = vmatprep.subr.mxu0 0.0
      %362 = vmatpush2.msra.mxu0 0.0
      %363 = vmatprep.subr.mxu0 0.0
      %364 = vmatpush2.msra.mxu0 0.0
      %365 = vmatprep.subr.mxu0 0.0
      %366 = vmatpush2.msra.mxu0 0.0
      %367 = vmatprep.subr.mxu0 0.0
      %368 = vmatpush2.msra.mxu0 0.0
      %369 = vmatprep.subr.mxu0 0.0
      %370 = vmatpush2.msra.mxu0 0.0
      %371 = vmatprep.subr.mxu0 0.0
      %372 = vmatpush2.msra.mxu0 0.0
      %373 = vmatprep.subr.mxu0 0.0
      %374 = vmatpush2.msra.mxu0 0.0
      %375 = vmatprep.subr.mxu0 0.0
      %376 = vmatpush2.msra.mxu0 0.0
      %377 = vmatprep.mubr.f32.mxu0 0.0
      %378 = vmatmul.mubr.f32.gmra.mxu0 %v286
      %v379 = vpop.f32.mrf.mxu0
      %v380 = vadd.f32 0.0, %v379
      %v381 = vpop.f32.mrf.mxu0
      %382 = vmatprep.mubr.f32.mxu0 0.0
      %383 = vmatmul.mubr.f32.gmra.mxu0 %v289
      %v384 = vpop.f32.mrf.mxu0
      %v385 = vadd.f32 0.0, %v384
      %v386 = vpop.f32.mrf.mxu0
      %387 = vmatprep.mubr.f32.mxu0 0.0
      %388 = vmatmul.mubr.f32.gmra.mxu0 %v292
      %v389 = vpop.f32.mrf.mxu0
      %v390 = vadd.f32 0.0, %v389
      %v391 = vpop.f32.mrf.mxu0
      %392 = vmatprep.mubr.f32.mxu0 0.0
      %393 = vmatmul.mubr.f32.gmra.mxu0 %v295
      %v394 = vpop.f32.mrf.mxu0
      %v395 = vadd.f32 0.0, %v394
      %v396 = vpop.f32.mrf.mxu0
      %397 = vmatprep.mubr.f32.mxu0 0.0
      %398 = vmatmul.mubr.f32.gmra.mxu0 %v298
      %v399 = vpop.f32.mrf.mxu0
      %v400 = vadd.f32 0.0, %v399
      %v401 = vpop.f32.mrf.mxu0
      %402 = vmatprep.mubr.f32.mxu0 0.0
      %403 = vmatmul.mubr.f32.gmra.mxu0 %v301
      %v404 = vpop.f32.mrf.mxu0
      %v405 = vadd.f32 0.0, %v404
      %v406 = vpop.f32.mrf.mxu0
      %407 = vmatprep.mubr.f32.mxu0 0.0
      %408 = vmatmul.mubr.f32.gmra.mxu0 %v304
      %v409 = vpop.f32.mrf.mxu0
      %v410 = vadd.f32 0.0, %v409
      %v411 = vpop.f32.mrf.mxu0
      %412 = vmatprep.mubr.f32.mxu0 0.0
      %413 = vmatmul.mubr.f32.gmra.mxu0 %v307
      %v414 = vpop.f32.mrf.mxu0
      %v415 = vadd.f32 0.0, %v414
      %v416 = vpop.f32.mrf.mxu0
      %417 = vdwg.mxu0
      %v419 = vsel %vm284, %v264, 0
      %v422 = vsel %vm284, %v265, 0
      %v425 = vsel %vm284, %v266, 0
      %v428 = vsel %vm284, %v267, 0
      %v431 = vsel %vm284, %v268, 0
      %v434 = vsel %vm284, %v269, 0
      %v437 = vsel %vm284, %v270, 0
      %v440 = vsel %vm284, %v271, 0
      %v443 = vsel %vm309, %v272, 0
      %445 = vmatprep.subr.mxu0 0.0
      %446 = vmatpush1.msra.mxu0 0.0
      %447 = vmatprep.subr.mxu0 0.0
      %448 = vmatpush1.msra.mxu0 0.0
      %449 = vmatprep.subr.mxu0 0.0
      %450 = vmatpush1.msra.mxu0 0.0
      %451 = vmatprep.subr.mxu0 0.0
      %452 = vmatpush1.msra.mxu0 0.0
      %453 = vmatprep.subr.mxu0 0.0
      %454 = vmatpush1.msra.mxu0 0.0
      %455 = vmatprep.subr.mxu0 0.0
      %456 = vmatpush1.msra.mxu0 0.0
      %457 = vmatprep.subr.mxu0 0.0
      %458 = vmatpush1.msra.mxu0 0.0
      %459 = vmatprep.subr.mxu0 0.0
      %460 = vmatpush1.msra.mxu0 0.0
      %461 = vmatprep.subr.mxu0 0.0
      %462 = vmatpush1.msra.mxu0 0.0
      %463 = vmatprep.subr.mxu0 0.0
      %464 = vmatpush1.msra.mxu0 0.0
      %465 = vmatprep.subr.mxu0 0.0
      %466 = vmatpush1.msra.mxu0 0.0
      %467 = vmatprep.subr.mxu0 0.0
      %468 = vmatpush1.msra.mxu0 0.0
      %469 = vmatprep.subr.mxu0 0.0
      %470 = vmatpush1.msra.mxu0 0.0
      %471 = vmatprep.subr.mxu0 0.0
      %472 = vmatpush1.msra.mxu0 0.0
      %473 = vmatprep.subr.mxu0 0.0
      %474 = vmatpush1.msra.mxu0 0.0
      %475 = vmatprep.subr.mxu0 0.0
      %476 = vmatpush1.msra.mxu0 %v443
      %477 = vmatprep.subr.mxu0 0.0
      %478 = vmatpush2.msra.mxu0 0.0
      %479 = vmatprep.subr.mxu0 0.0
      %480 = vmatpush2.msra.mxu0 0.0
      %481 = vmatprep.subr.mxu0 0.0
      %482 = vmatpush2.msra.mxu0 0.0
      %483 = vmatprep.subr.mxu0 0.0
      %484 = vmatpush2.msra.mxu0 0.0
      %485 = vmatprep.subr.mxu0 0.0
      %486 = vmatpush2.msra.mxu0 0.0
      %487 = vmatprep.subr.mxu0 0.0
      %488 = vmatpush2.msra.mxu0 0.0
      %489 = vmatprep.subr.mxu0 0.0
      %490 = vmatpush2.msra.mxu0 0.0
      %491 = vmatprep.subr.mxu0 0.0
      %492 = vmatpush2.msra.mxu0 0.0
      %493 = vmatprep.subr.mxu0 0.0
      %494 = vmatpush2.msra.mxu0 0.0
      %495 = vmatprep.subr.mxu0 0.0
      %496 = vmatpush2.msra.mxu0 0.0
      %497 = vmatprep.subr.mxu0 0.0
      %498 = vmatpush2.msra.mxu0 0.0
      %499 = vmatprep.subr.mxu0 0.0
      %500 = vmatpush2.msra.mxu0 0.0
      %501 = vmatprep.subr.mxu0 0.0
      %502 = vmatpush2.msra.mxu0 0.0
      %503 = vmatprep.subr.mxu0 0.0
      %504 = vmatpush2.msra.mxu0 0.0
      %505 = vmatprep.subr.mxu0 0.0
      %506 = vmatpush2.msra.mxu0 0.0
      %507 = vmatprep.subr.mxu0 0.0
      %508 = vmatpush2.msra.mxu0 0.0
      %509 = vmatprep.mubr.f32.mxu0 0.0
      %510 = vmatmul.mubr.f32.gmra.mxu0 %v419
      %v511 = vpop.f32.mrf.mxu0
      %v512 = vadd.f32 %v380, %v511
      %v513 = vpop.f32.mrf.mxu0
      %514 = vmatprep.mubr.f32.mxu0 0.0
      %515 = vmatmul.mubr.f32.gmra.mxu0 %v422
      %v516 = vpop.f32.mrf.mxu0
      %v517 = vadd.f32 %v385, %v516
      %v518 = vpop.f32.mrf.mxu0
      %519 = vmatprep.mubr.f32.mxu0 0.0
      %520 = vmatmul.mubr.f32.gmra.mxu0 %v425
      %v521 = vpop.f32.mrf.mxu0
      %v522 = vadd.f32 %v390, %v521
      %v523 = vpop.f32.mrf.mxu0
      %524 = vmatprep.mubr.f32.mxu0 0.0
      %525 = vmatmul.mubr.f32.gmra.mxu0 %v428
      %v526 = vpop.f32.mrf.mxu0
      %v527 = vadd.f32 %v395, %v526
      %v528 = vpop.f32.mrf.mxu0
      %529 = vmatprep.mubr.f32.mxu0 0.0
      %530 = vmatmul.mubr.f32.gmra.mxu0 %v431
      %v531 = vpop.f32.mrf.mxu0
      %v532 = vadd.f32 %v400, %v531
      %v533 = vpop.f32.mrf.mxu0
      %534 = vmatprep.mubr.f32.mxu0 0.0
      %535 = vmatmul.mubr.f32.gmra.mxu0 %v434
      %v536 = vpop.f32.mrf.mxu0
      %v537 = vadd.f32 %v405, %v536
      %v538 = vpop.f32.mrf.mxu0
      %539 = vmatprep.mubr.f32.mxu0 0.0
      %540 = vmatmul.mubr.f32.gmra.mxu0 %v437
      %v541 = vpop.f32.mrf.mxu0
      %v542 = vadd.f32 %v410, %v541
      %v543 = vpop.f32.mrf.mxu0
      %544 = vmatprep.mubr.f32.mxu0 0.0
      %545 = vmatmul.mubr.f32.gmra.mxu0 %v440
      %v546 = vpop.f32.mrf.mxu0
      %v547 = vadd.f32 %v415, %v546
      %v548 = vpop.f32.mrf.mxu0
      %549 = vdwg.mxu0
      %v550 = vld [vmem:[%s232 + $0x1] sm:$0xff]
      %v551 = vld [vmem:[%s232 + $0x11] sm:$0xff]
      %v552 = vld [vmem:[%s232 + $0x21] sm:$0xff]
      %v553 = vld [vmem:[%s232 + $0x31] sm:$0xff]
      %v554 = vld [vmem:[%s232 + $0x41] sm:$0xff]
      %v555 = vld [vmem:[%s232 + $0x51] sm:$0xff]
      %v556 = vld [vmem:[%s232 + $0x61] sm:$0xff]
      %v557 = vld [vmem:[%s232 + $0x71] sm:$0xff]
      %s558 = scalar_lea.vmem %s239, 8
      %v559 = vld [vmem:[%s558] sm:$0xf]
      %v561 = vsel %vm284, %v550, 0
      %v564 = vsel %vm284, %v551, 0
      %v567 = vsel %vm284, %v552, 0
      %v570 = vsel %vm284, %v553, 0
      %v573 = vsel %vm284, %v554, 0
      %v576 = vsel %vm284, %v555, 0
      %v579 = vsel %vm284, %v556, 0
      %v582 = vsel %vm284, %v557, 0
      %v585 = vsel %vm309, %v559, 0
      %587 = vmatprep.subr.mxu0 0.0
      %588 = vmatpush1.msra.mxu0 0.0
      %589 = vmatprep.subr.mxu0 0.0
      %590 = vmatpush1.msra.mxu0 0.0
      %591 = vmatprep.subr.mxu0 0.0
      %592 = vmatpush1.msra.mxu0 0.0
      %593 = vmatprep.subr.mxu0 0.0
      %594 = vmatpush1.msra.mxu0 0.0
      %595 = vmatprep.subr.mxu0 0.0
      %596 = vmatpush1.msra.mxu0 0.0
      %597 = vmatprep.subr.mxu0 0.0
      %598 = vmatpush1.msra.mxu0 0.0
      %599 = vmatprep.subr.mxu0 0.0
      %600 = vmatpush1.msra.mxu0 0.0
      %601 = vmatprep.subr.mxu0 0.0
      %602 = vmatpush1.msra.mxu0 0.0
      %603 = vmatprep.subr.mxu0 0.0
      %604 = vmatpush1.msra.mxu0 0.0
      %605 = vmatprep.subr.mxu0 0.0
      %606 = vmatpush1.msra.mxu0 0.0
      %607 = vmatprep.subr.mxu0 0.0
      %608 = vmatpush1.msra.mxu0 0.0
      %609 = vmatprep.subr.mxu0 0.0
      %610 = vmatpush1.msra.mxu0 0.0
      %611 = vmatprep.subr.mxu0 0.0
      %612 = vmatpush1.msra.mxu0 0.0
      %613 = vmatprep.subr.mxu0 0.0
      %614 = vmatpush1.msra.mxu0 0.0
      %615 = vmatprep.subr.mxu0 0.0
      %616 = vmatpush1.msra.mxu0 0.0
      %617 = vmatprep.subr.mxu0 0.0
      %618 = vmatpush1.msra.mxu0 %v585
      %619 = vmatprep.subr.mxu0 0.0
      %620 = vmatpush2.msra.mxu0 0.0
      %621 = vmatprep.subr.mxu0 0.0
      %622 = vmatpush2.msra.mxu0 0.0
      %623 = vmatprep.subr.mxu0 0.0
      %624 = vmatpush2.msra.mxu0 0.0
      %625 = vmatprep.subr.mxu0 0.0
      %626 = vmatpush2.msra.mxu0 0.0
      %627 = vmatprep.subr.mxu0 0.0
      %628 = vmatpush2.msra.mxu0 0.0
      %629 = vmatprep.subr.mxu0 0.0
      %630 = vmatpush2.msra.mxu0 0.0
      %631 = vmatprep.subr.mxu0 0.0
      %632 = vmatpush2.msra.mxu0 0.0
      %633 = vmatprep.subr.mxu0 0.0
      %634 = vmatpush2.msra.mxu0 0.0
      %635 = vmatprep.subr.mxu0 0.0
      %636 = vmatpush2.msra.mxu0 0.0
      %637 = vmatprep.subr.mxu0 0.0
      %638 = vmatpush2.msra.mxu0 0.0
      %639 = vmatprep.subr.mxu0 0.0
      %640 = vmatpush2.msra.mxu0 0.0
      %641 = vmatprep.subr.mxu0 0.0
      %642 = vmatpush2.msra.mxu0 0.0
      %643 = vmatprep.subr.mxu0 0.0
      %644 = vmatpush2.msra.mxu0 0.0
      %645 = vmatprep.subr.mxu0 0.0
      %646 = vmatpush2.msra.mxu0 0.0
      %647 = vmatprep.subr.mxu0 0.0
      %648 = vmatpush2.msra.mxu0 0.0
      %649 = vmatprep.subr.mxu0 0.0
      %650 = vmatpush2.msra.mxu0 0.0
      %651 = vmatprep.mubr.f32.mxu0 0.0
      %652 = vmatmul.mubr.f32.gmra.mxu0 %v561
      %v653 = vpop.f32.mrf.mxu0
      %v654 = vadd.f32 0.0, %v653
      %v655 = vpop.f32.mrf.mxu0
      %656 = vmatprep.mubr.f32.mxu0 0.0
      %657 = vmatmul.mubr.f32.gmra.mxu0 %v564
      %v658 = vpop.f32.mrf.mxu0
      %v659 = vadd.f32 0.0, %v658
      %v660 = vpop.f32.mrf.mxu0
      %661 = vmatprep.mubr.f32.mxu0 0.0
      %662 = vmatmul.mubr.f32.gmra.mxu0 %v567
      %v663 = vpop.f32.mrf.mxu0
      %v664 = vadd.f32 0.0, %v663
      %v665 = vpop.f32.mrf.mxu0
      %666 = vmatprep.mubr.f32.mxu0 0.0
      %667 = vmatmul.mubr.f32.gmra.mxu0 %v570
      %v668 = vpop.f32.mrf.mxu0
      %v669 = vadd.f32 0.0, %v668
      %v670 = vpop.f32.mrf.mxu0
      %671 = vmatprep.mubr.f32.mxu0 0.0
      %672 = vmatmul.mubr.f32.gmra.mxu0 %v573
      %v673 = vpop.f32.mrf.mxu0
      %v674 = vadd.f32 0.0, %v673
      %v675 = vpop.f32.mrf.mxu0
      %676 = vmatprep.mubr.f32.mxu0 0.0
      %677 = vmatmul.mubr.f32.gmra.mxu0 %v576
      %v678 = vpop.f32.mrf.mxu0
      %v679 = vadd.f32 0.0, %v678
      %v680 = vpop.f32.mrf.mxu0
      %681 = vmatprep.mubr.f32.mxu0 0.0
      %682 = vmatmul.mubr.f32.gmra.mxu0 %v579
      %v683 = vpop.f32.mrf.mxu0
      %v684 = vadd.f32 0.0, %v683
      %v685 = vpop.f32.mrf.mxu0
      %686 = vmatprep.mubr.f32.mxu0 0.0
      %687 = vmatmul.mubr.f32.gmra.mxu0 %v582
      %v688 = vpop.f32.mrf.mxu0
      %v689 = vadd.f32 0.0, %v688
      %v690 = vpop.f32.mrf.mxu0
      %691 = vdwg.mxu0
      %v692 = vadd.f32 %v512, %v654
      %v693 = vadd.f32 %v517, %v659
      %v694 = vadd.f32 %v522, %v664
      %v695 = vadd.f32 %v527, %v669
      %v696 = vadd.f32 %v532, %v674
      %v697 = vadd.f32 %v537, %v679
      %v698 = vadd.f32 %v542, %v684
      %v699 = vadd.f32 %v547, %v689
      %s700 = scalar_lea.vmem %s232, 288
      %v701 = vld [vmem:[%s700] sm:$0xff]
      %v702 = vld [vmem:[%s700 + $0x10] sm:$0xff]
      %v703 = vld [vmem:[%s700 + $0x20] sm:$0xff]
      %v704 = vld [vmem:[%s700 + $0x30] sm:$0xff]
      %v705 = vld [vmem:[%s700 + $0x40] sm:$0xff]
      %v706 = vld [vmem:[%s700 + $0x50] sm:$0xff]
      %v707 = vld [vmem:[%s700 + $0x60] sm:$0xff]
      %v708 = vld [vmem:[%s700 + $0x70] sm:$0xff]
      %s709 = scalar_lea.vmem %s239, 12
      %v710 = vld [vmem:[%s709] sm:$0xf]
      %v712 = vsel %vm284, %v701, 0
      %v715 = vsel %vm284, %v702, 0
      %v718 = vsel %vm284, %v703, 0
      %v721 = vsel %vm284, %v704, 0
      %v724 = vsel %vm284, %v705, 0
      %v727 = vsel %vm284, %v706, 0
      %v730 = vsel %vm284, %v707, 0
      %v733 = vsel %vm284, %v708, 0
      %v736 = vsel %vm309, %v710, 0
      %738 = vmatprep.subr.mxu0 0.0
      %739 = vmatpush1.msra.mxu0 0.0
      %740 = vmatprep.subr.mxu0 0.0
      %741 = vmatpush1.msra.mxu0 0.0
      %742 = vmatprep.subr.mxu0 0.0
      %743 = vmatpush1.msra.mxu0 0.0
      %744 = vmatprep.subr.mxu0 0.0
      %745 = vmatpush1.msra.mxu0 0.0
      %746 = vmatprep.subr.mxu0 0.0
      %747 = vmatpush1.msra.mxu0 0.0
      %748 = vmatprep.subr.mxu0 0.0
      %749 = vmatpush1.msra.mxu0 0.0
      %750 = vmatprep.subr.mxu0 0.0
      %751 = vmatpush1.msra.mxu0 0.0
      %752 = vmatprep.subr.mxu0 0.0
      %753 = vmatpush1.msra.mxu0 0.0
      %754 = vmatprep.subr.mxu0 0.0
      %755 = vmatpush1.msra.mxu0 0.0
      %756 = vmatprep.subr.mxu0 0.0
      %757 = vmatpush1.msra.mxu0 0.0
      %758 = vmatprep.subr.mxu0 0.0
      %759 = vmatpush1.msra.mxu0 0.0
      %760 = vmatprep.subr.mxu0 0.0
      %761 = vmatpush1.msra.mxu0 0.0
      %762 = vmatprep.subr.mxu0 0.0
      %763 = vmatpush1.msra.mxu0 0.0
      %764 = vmatprep.subr.mxu0 0.0
      %765 = vmatpush1.msra.mxu0 0.0
      %766 = vmatprep.subr.mxu0 0.0
      %767 = vmatpush1.msra.mxu0 0.0
      %768 = vmatprep.subr.mxu0 0.0
      %769 = vmatpush1.msra.mxu0 %v736
      %770 = vmatprep.subr.mxu0 0.0
      %771 = vmatpush2.msra.mxu0 0.0
      %772 = vmatprep.subr.mxu0 0.0
      %773 = vmatpush2.msra.mxu0 0.0
      %774 = vmatprep.subr.mxu0 0.0
      %775 = vmatpush2.msra.mxu0 0.0
      %776 = vmatprep.subr.mxu0 0.0
      %777 = vmatpush2.msra.mxu0 0.0
      %778 = vmatprep.subr.mxu0 0.0
      %779 = vmatpush2.msra.mxu0 0.0
      %780 = vmatprep.subr.mxu0 0.0
      %781 = vmatpush2.msra.mxu0 0.0
      %782 = vmatprep.subr.mxu0 0.0
      %783 = vmatpush2.msra.mxu0 0.0
      %784 = vmatprep.subr.mxu0 0.0
      %785 = vmatpush2.msra.mxu0 0.0
      %786 = vmatprep.subr.mxu0 0.0
      %787 = vmatpush2.msra.mxu0 0.0
      %788 = vmatprep.subr.mxu0 0.0
      %789 = vmatpush2.msra.mxu0 0.0
      %790 = vmatprep.subr.mxu0 0.0
      %791 = vmatpush2.msra.mxu0 0.0
      %792 = vmatprep.subr.mxu0 0.0
      %793 = vmatpush2.msra.mxu0 0.0
      %794 = vmatprep.subr.mxu0 0.0
      %795 = vmatpush2.msra.mxu0 0.0
      %796 = vmatprep.subr.mxu0 0.0
      %797 = vmatpush2.msra.mxu0 0.0
      %798 = vmatprep.subr.mxu0 0.0
      %799 = vmatpush2.msra.mxu0 0.0
      %800 = vmatprep.subr.mxu0 0.0
      %801 = vmatpush2.msra.mxu0 0.0
      %802 = vmatprep.mubr.f32.mxu0 0.0
      %803 = vmatmul.mubr.f32.gmra.mxu0 %v712
      %v804 = vpop.f32.mrf.mxu0
      %v805 = vadd.f32 0.0, %v804
      %v806 = vpop.f32.mrf.mxu0
      %807 = vmatprep.mubr.f32.mxu0 0.0
      %808 = vmatmul.mubr.f32.gmra.mxu0 %v715
      %v809 = vpop.f32.mrf.mxu0
      %v810 = vadd.f32 0.0, %v809
      %v811 = vpop.f32.mrf.mxu0
      %812 = vmatprep.mubr.f32.mxu0 0.0
      %813 = vmatmul.mubr.f32.gmra.mxu0 %v718
      %v814 = vpop.f32.mrf.mxu0
      %v815 = vadd.f32 0.0, %v814
      %v816 = vpop.f32.mrf.mxu0
      %817 = vmatprep.mubr.f32.mxu0 0.0
      %818 = vmatmul.mubr.f32.gmra.mxu0 %v721
      %v819 = vpop.f32.mrf.mxu0
      %v820 = vadd.f32 0.0, %v819
      %v821 = vpop.f32.mrf.mxu0
      %822 = vmatprep.mubr.f32.mxu0 0.0
      %823 = vmatmul.mubr.f32.gmra.mxu0 %v724
      %v824 = vpop.f32.mrf.mxu0
      %v825 = vadd.f32 0.0, %v824
      %v826 = vpop.f32.mrf.mxu0
      %827 = vmatprep.mubr.f32.mxu0 0.0
      %828 = vmatmul.mubr.f32.gmra.mxu0 %v727
      %v829 = vpop.f32.mrf.mxu0
      %v830 = vadd.f32 0.0, %v829
      %v831 = vpop.f32.mrf.mxu0
      %832 = vmatprep.mubr.f32.mxu0 0.0
      %833 = vmatmul.mubr.f32.gmra.mxu0 %v730
      %v834 = vpop.f32.mrf.mxu0
      %v835 = vadd.f32 0.0, %v834
      %v836 = vpop.f32.mrf.mxu0
      %837 = vmatprep.mubr.f32.mxu0 0.0
      %838 = vmatmul.mubr.f32.gmra.mxu0 %v733
      %v839 = vpop.f32.mrf.mxu0
      %v840 = vadd.f32 0.0, %v839
      %v841 = vpop.f32.mrf.mxu0
      %842 = vdwg.mxu0
      %v843 = vadd.f32 %v692, %v805
      %v844 = vadd.f32 %v693, %v810
      %v845 = vadd.f32 %v694, %v815
      %v846 = vadd.f32 %v695, %v820
      %v847 = vadd.f32 %v696, %v825
      %v848 = vadd.f32 %v697, %v830
      %v849 = vadd.f32 %v698, %v835
      %v850 = vadd.f32 %v699, %v840
      %s851 = scalar_lea.vmem %s232, 432
      %v852 = vld [vmem:[%s851] sm:$0xff]
      %v853 = vld [vmem:[%s851 + $0x10] sm:$0xff]
      %v854 = vld [vmem:[%s851 + $0x20] sm:$0xff]
      %v855 = vld [vmem:[%s851 + $0x30] sm:$0xff]
      %v856 = vld [vmem:[%s851 + $0x40] sm:$0xff]
      %v857 = vld [vmem:[%s851 + $0x50] sm:$0xff]
      %v858 = vld [vmem:[%s851 + $0x60] sm:$0xff]
      %v859 = vld [vmem:[%s851 + $0x70] sm:$0xff]
      %s860 = scalar_lea.vmem %s239, 16
      %v861 = vld [vmem:[%s860] sm:$0xf]
      %v863 = vsel %vm284, %v852, 0
      %v866 = vsel %vm284, %v853, 0
      %v869 = vsel %vm284, %v854, 0
      %v872 = vsel %vm284, %v855, 0
      %v875 = vsel %vm284, %v856, 0
      %v878 = vsel %vm284, %v857, 0
      %v881 = vsel %vm284, %v858, 0
      %v884 = vsel %vm284, %v859, 0
      %v887 = vsel %vm309, %v861, 0
      %889 = vmatprep.subr.mxu0 0.0
      %890 = vmatpush1.msra.mxu0 0.0
      %891 = vmatprep.subr.mxu0 0.0
      %892 = vmatpush1.msra.mxu0 0.0
      %893 = vmatprep.subr.mxu0 0.0
      %894 = vmatpush1.msra.mxu0 0.0
      %895 = vmatprep.subr.mxu0 0.0
      %896 = vmatpush1.msra.mxu0 0.0
      %897 = vmatprep.subr.mxu0 0.0
      %898 = vmatpush1.msra.mxu0 0.0
      %899 = vmatprep.subr.mxu0 0.0
      %900 = vmatpush1.msra.mxu0 0.0
      %901 = vmatprep.subr.mxu0 0.0
      %902 = vmatpush1.msra.mxu0 0.0
      %903 = vmatprep.subr.mxu0 0.0
      %904 = vmatpush1.msra.mxu0 0.0
      %905 = vmatprep.subr.mxu0 0.0
      %906 = vmatpush1.msra.mxu0 0.0
      %907 = vmatprep.subr.mxu0 0.0
      %908 = vmatpush1.msra.mxu0 0.0
      %909 = vmatprep.subr.mxu0 0.0
      %910 = vmatpush1.msra.mxu0 0.0
      %911 = vmatprep.subr.mxu0 0.0
      %912 = vmatpush1.msra.mxu0 0.0
      %913 = vmatprep.subr.mxu0 0.0
      %914 = vmatpush1.msra.mxu0 0.0
      %915 = vmatprep.subr.mxu0 0.0
      %916 = vmatpush1.msra.mxu0 0.0
      %917 = vmatprep.subr.mxu0 0.0
      %918 = vmatpush1.msra.mxu0 0.0
      %919 = vmatprep.subr.mxu0 0.0
      %920 = vmatpush1.msra.mxu0 %v887
      %921 = vmatprep.subr.mxu0 0.0
      %922 = vmatpush2.msra.mxu0 0.0
      %923 = vmatprep.subr.mxu0 0.0
      %924 = vmatpush2.msra.mxu0 0.0
      %925 = vmatprep.subr.mxu0 0.0
      %926 = vmatpush2.msra.mxu0 0.0
      %927 = vmatprep.subr.mxu0 0.0
      %928 = vmatpush2.msra.mxu0 0.0
      %929 = vmatprep.subr.mxu0 0.0
      %930 = vmatpush2.msra.mxu0 0.0
      %931 = vmatprep.subr.mxu0 0.0
      %932 = vmatpush2.msra.mxu0 0.0
      %933 = vmatprep.subr.mxu0 0.0
      %934 = vmatpush2.msra.mxu0 0.0
      %935 = vmatprep.subr.mxu0 0.0
      %936 = vmatpush2.msra.mxu0 0.0
      %937 = vmatprep.subr.mxu0 0.0
      %938 = vmatpush2.msra.mxu0 0.0
      %939 = vmatprep.subr.mxu0 0.0
      %940 = vmatpush2.msra.mxu0 0.0
      %941 = vmatprep.subr.mxu0 0.0
      %942 = vmatpush2.msra.mxu0 0.0
      %943 = vmatprep.subr.mxu0 0.0
      %944 = vmatpush2.msra.mxu0 0.0
      %945 = vmatprep.subr.mxu0 0.0
      %946 = vmatpush2.msra.mxu0 0.0
      %947 = vmatprep.subr.mxu0 0.0
      %948 = vmatpush2.msra.mxu0 0.0
      %949 = vmatprep.subr.mxu0 0.0
      %950 = vmatpush2.msra.mxu0 0.0
      %951 = vmatprep.subr.mxu0 0.0
      %952 = vmatpush2.msra.mxu0 0.0
      %953 = vmatprep.mubr.f32.mxu0 0.0
      %954 = vmatmul.mubr.f32.gmra.mxu0 %v863
      %v955 = vpop.f32.mrf.mxu0
      %v956 = vadd.f32 0.0, %v955
      %v957 = vpop.f32.mrf.mxu0
      %958 = vmatprep.mubr.f32.mxu0 0.0
      %959 = vmatmul.mubr.f32.gmra.mxu0 %v866
      %v960 = vpop.f32.mrf.mxu0
      %v961 = vadd.f32 0.0, %v960
      %v962 = vpop.f32.mrf.mxu0
      %963 = vmatprep.mubr.f32.mxu0 0.0
      %964 = vmatmul.mubr.f32.gmra.mxu0 %v869
      %v965 = vpop.f32.mrf.mxu0
      %v966 = vadd.f32 0.0, %v965
      %v967 = vpop.f32.mrf.mxu0
      %968 = vmatprep.mubr.f32.mxu0 0.0
      %969 = vmatmul.mubr.f32.gmra.mxu0 %v872
      %v970 = vpop.f32.mrf.mxu0
      %v971 = vadd.f32 0.0, %v970
      %v972 = vpop.f32.mrf.mxu0
      %973 = vmatprep.mubr.f32.mxu0 0.0
      %974 = vmatmul.mubr.f32.gmra.mxu0 %v875
      %v975 = vpop.f32.mrf.mxu0
      %v976 = vadd.f32 0.0, %v975
      %v977 = vpop.f32.mrf.mxu0
      %978 = vmatprep.mubr.f32.mxu0 0.0
      %979 = vmatmul.mubr.f32.gmra.mxu0 %v878
      %v980 = vpop.f32.mrf.mxu0
      %v981 = vadd.f32 0.0, %v980
      %v982 = vpop.f32.mrf.mxu0
      %983 = vmatprep.mubr.f32.mxu0 0.0
      %984 = vmatmul.mubr.f32.gmra.mxu0 %v881
      %v985 = vpop.f32.mrf.mxu0
      %v986 = vadd.f32 0.0, %v985
      %v987 = vpop.f32.mrf.mxu0
      %988 = vmatprep.mubr.f32.mxu0 0.0
      %989 = vmatmul.mubr.f32.gmra.mxu0 %v884
      %v990 = vpop.f32.mrf.mxu0
      %v991 = vadd.f32 0.0, %v990
      %v992 = vpop.f32.mrf.mxu0
      %993 = vdwg.mxu0
      %v994 = vadd.f32 %v843, %v956
      %v995 = vadd.f32 %v844, %v961
      %v996 = vadd.f32 %v845, %v966
      %v997 = vadd.f32 %v846, %v971
      %v998 = vadd.f32 %v847, %v976
      %v999 = vadd.f32 %v848, %v981
      %v1000 = vadd.f32 %v849, %v986
      %v1001 = vadd.f32 %v850, %v991
      %v1002 = vld [vmem:[%s700 + $0x1] sm:$0xff]
      %v1003 = vld [vmem:[%s700 + $0x11] sm:$0xff]
      %v1004 = vld [vmem:[%s700 + $0x21] sm:$0xff]
      %v1005 = vld [vmem:[%s700 + $0x31] sm:$0xff]
      %v1006 = vld [vmem:[%s700 + $0x41] sm:$0xff]
      %v1007 = vld [vmem:[%s700 + $0x51] sm:$0xff]
      %v1008 = vld [vmem:[%s700 + $0x61] sm:$0xff]
      %v1009 = vld [vmem:[%s700 + $0x71] sm:$0xff]
      %s1010 = scalar_lea.vmem %s239, 20
      %v1011 = vld [vmem:[%s1010] sm:$0xf]
      %v1013 = vsel %vm284, %v1002, 0
      %v1016 = vsel %vm284, %v1003, 0
      %v1019 = vsel %vm284, %v1004, 0
      %v1022 = vsel %vm284, %v1005, 0
      %v1025 = vsel %vm284, %v1006, 0
      %v1028 = vsel %vm284, %v1007, 0
      %v1031 = vsel %vm284, %v1008, 0
      %v1034 = vsel %vm284, %v1009, 0
      %v1037 = vsel %vm309, %v1011, 0
      %1039 = vmatprep.subr.mxu0 0.0
      %1040 = vmatpush1.msra.mxu0 0.0
      %1041 = vmatprep.subr.mxu0 0.0
      %1042 = vmatpush1.msra.mxu0 0.0
      %1043 = vmatprep.subr.mxu0 0.0
      %1044 = vmatpush1.msra.mxu0 0.0
      %1045 = vmatprep.subr.mxu0 0.0
      %1046 = vmatpush1.msra.mxu0 0.0
      %1047 = vmatprep.subr.mxu0 0.0
      %1048 = vmatpush1.msra.mxu0 0.0
      %1049 = vmatprep.subr.mxu0 0.0
      %1050 = vmatpush1.msra.mxu0 0.0
      %1051 = vmatprep.subr.mxu0 0.0
      %1052 = vmatpush1.msra.mxu0 0.0
      %1053 = vmatprep.subr.mxu0 0.0
      %1054 = vmatpush1.msra.mxu0 0.0
      %1055 = vmatprep.subr.mxu0 0.0
      %1056 = vmatpush1.msra.mxu0 0.0
      %1057 = vmatprep.subr.mxu0 0.0
      %1058 = vmatpush1.msra.mxu0 0.0
      %1059 = vmatprep.subr.mxu0 0.0
      %1060 = vmatpush1.msra.mxu0 0.0
      %1061 = vmatprep.subr.mxu0 0.0
      %1062 = vmatpush1.msra.mxu0 0.0
      %1063 = vmatprep.subr.mxu0 0.0
      %1064 = vmatpush1.msra.mxu0 0.0
      %1065 = vmatprep.subr.mxu0 0.0
      %1066 = vmatpush1.msra.mxu0 0.0
      %1067 = vmatprep.subr.mxu0 0.0
      %1068 = vmatpush1.msra.mxu0 0.0
      %1069 = vmatprep.subr.mxu0 0.0
      %1070 = vmatpush1.msra.mxu0 %v1037
      %1071 = vmatprep.subr.mxu0 0.0
      %1072 = vmatpush2.msra.mxu0 0.0
      %1073 = vmatprep.subr.mxu0 0.0
      %1074 = vmatpush2.msra.mxu0 0.0
      %1075 = vmatprep.subr.mxu0 0.0
      %1076 = vmatpush2.msra.mxu0 0.0
      %1077 = vmatprep.subr.mxu0 0.0
      %1078 = vmatpush2.msra.mxu0 0.0
      %1079 = vmatprep.subr.mxu0 0.0
      %1080 = vmatpush2.msra.mxu0 0.0
      %1081 = vmatprep.subr.mxu0 0.0
      %1082 = vmatpush2.msra.mxu0 0.0
      %1083 = vmatprep.subr.mxu0 0.0
      %1084 = vmatpush2.msra.mxu0 0.0
      %1085 = vmatprep.subr.mxu0 0.0
      %1086 = vmatpush2.msra.mxu0 0.0
      %1087 = vmatprep.subr.mxu0 0.0
      %1088 = vmatpush2.msra.mxu0 0.0
      %1089 = vmatprep.subr.mxu0 0.0
      %1090 = vmatpush2.msra.mxu0 0.0
      %1091 = vmatprep.subr.mxu0 0.0
      %1092 = vmatpush2.msra.mxu0 0.0
      %1093 = vmatprep.subr.mxu0 0.0
      %1094 = vmatpush2.msra.mxu0 0.0
      %1095 = vmatprep.subr.mxu0 0.0
      %1096 = vmatpush2.msra.mxu0 0.0
      %1097 = vmatprep.subr.mxu0 0.0
      %1098 = vmatpush2.msra.mxu0 0.0
      %1099 = vmatprep.subr.mxu0 0.0
      %1100 = vmatpush2.msra.mxu0 0.0
      %1101 = vmatprep.subr.mxu0 0.0
      %1102 = vmatpush2.msra.mxu0 0.0
      %1103 = vmatprep.mubr.f32.mxu0 0.0
      %1104 = vmatmul.mubr.f32.gmra.mxu0 %v1013
      %v1105 = vpop.f32.mrf.mxu0
      %v1106 = vadd.f32 0.0, %v1105
      %v1107 = vpop.f32.mrf.mxu0
      %1108 = vmatprep.mubr.f32.mxu0 0.0
      %1109 = vmatmul.mubr.f32.gmra.mxu0 %v1016
      %v1110 = vpop.f32.mrf.mxu0
      %v1111 = vadd.f32 0.0, %v1110
      %v1112 = vpop.f32.mrf.mxu0
      %1113 = vmatprep.mubr.f32.mxu0 0.0
      %1114 = vmatmul.mubr.f32.gmra.mxu0 %v1019
      %v1115 = vpop.f32.mrf.mxu0
      %v1116 = vadd.f32 0.0, %v1115
      %v1117 = vpop.f32.mrf.mxu0
      %1118 = vmatprep.mubr.f32.mxu0 0.0
      %1119 = vmatmul.mubr.f32.gmra.mxu0 %v1022
      %v1120 = vpop.f32.mrf.mxu0
      %v1121 = vadd.f32 0.0, %v1120
      %v1122 = vpop.f32.mrf.mxu0
      %1123 = vmatprep.mubr.f32.mxu0 0.0
      %1124 = vmatmul.mubr.f32.gmra.mxu0 %v1025
      %v1125 = vpop.f32.mrf.mxu0
      %v1126 = vadd.f32 0.0, %v1125
      %v1127 = vpop.f32.mrf.mxu0
      %1128 = vmatprep.mubr.f32.mxu0 0.0
      %1129 = vmatmul.mubr.f32.gmra.mxu0 %v1028
      %v1130 = vpop.f32.mrf.mxu0
      %v1131 = vadd.f32 0.0, %v1130
      %v1132 = vpop.f32.mrf.mxu0
      %1133 = vmatprep.mubr.f32.mxu0 0.0
      %1134 = vmatmul.mubr.f32.gmra.mxu0 %v1031
      %v1135 = vpop.f32.mrf.mxu0
      %v1136 = vadd.f32 0.0, %v1135
      %v1137 = vpop.f32.mrf.mxu0
      %1138 = vmatprep.mubr.f32.mxu0 0.0
      %1139 = vmatmul.mubr.f32.gmra.mxu0 %v1034
      %v1140 = vpop.f32.mrf.mxu0
      %v1141 = vadd.f32 0.0, %v1140
      %v1142 = vpop.f32.mrf.mxu0
      %1143 = vdwg.mxu0
      %v1144 = vadd.f32 %v994, %v1106
      %v1145 = vadd.f32 %v995, %v1111
      %v1146 = vadd.f32 %v996, %v1116
      %v1147 = vadd.f32 %v997, %v1121
      %v1148 = vadd.f32 %v998, %v1126
      %v1149 = vadd.f32 %v999, %v1131
      %v1150 = vadd.f32 %v1000, %v1136
      %v1151 = vadd.f32 %v1001, %v1141
      %s1152 = scalar_lea.vmem %s232, 16
      %v1153 = vld [vmem:[%s1152] sm:$0xff]
      %v1154 = vld [vmem:[%s1152 + $0x10] sm:$0xff]
      %v1155 = vld [vmem:[%s1152 + $0x20] sm:$0xff]
      %v1156 = vld [vmem:[%s1152 + $0x30] sm:$0xff]
      %v1157 = vld [vmem:[%s1152 + $0x40] sm:$0xff]
      %v1158 = vld [vmem:[%s1152 + $0x50] sm:$0xff]
      %v1159 = vld [vmem:[%s1152 + $0x60] sm:$0xff]
      %v1160 = vld [vmem:[%s1152 + $0x70] sm:$0xff]
      %s1161 = scalar_lea.vmem %s239, 24
      %v1162 = vld [vmem:[%s1161] sm:$0xf]
      %v1164 = vsel %vm284, %v1153, 0
      %v1167 = vsel %vm284, %v1154, 0
      %v1170 = vsel %vm284, %v1155, 0
      %v1173 = vsel %vm284, %v1156, 0
      %v1176 = vsel %vm284, %v1157, 0
      %v1179 = vsel %vm284, %v1158, 0
      %v1182 = vsel %vm284, %v1159, 0
      %v1185 = vsel %vm284, %v1160, 0
      %v1188 = vsel %vm309, %v1162, 0
      %1190 = vmatprep.subr.mxu0 0.0
      %1191 = vmatpush1.msra.mxu0 0.0
      %1192 = vmatprep.subr.mxu0 0.0
      %1193 = vmatpush1.msra.mxu0 0.0
      %1194 = vmatprep.subr.mxu0 0.0
      %1195 = vmatpush1.msra.mxu0 0.0
      %1196 = vmatprep.subr.mxu0 0.0
      %1197 = vmatpush1.msra.mxu0 0.0
      %1198 = vmatprep.subr.mxu0 0.0
      %1199 = vmatpush1.msra.mxu0 0.0
      %1200 = vmatprep.subr.mxu0 0.0
      %1201 = vmatpush1.msra.mxu0 0.0
      %1202 = vmatprep.subr.mxu0 0.0
      %1203 = vmatpush1.msra.mxu0 0.0
      %1204 = vmatprep.subr.mxu0 0.0
      %1205 = vmatpush1.msra.mxu0 0.0
      %1206 = vmatprep.subr.mxu0 0.0
      %1207 = vmatpush1.msra.mxu0 0.0
      %1208 = vmatprep.subr.mxu0 0.0
      %1209 = vmatpush1.msra.mxu0 0.0
      %1210 = vmatprep.subr.mxu0 0.0
      %1211 = vmatpush1.msra.mxu0 0.0
      %1212 = vmatprep.subr.mxu0 0.0
      %1213 = vmatpush1.msra.mxu0 0.0
      %1214 = vmatprep.subr.mxu0 0.0
      %1215 = vmatpush1.msra.mxu0 0.0
      %1216 = vmatprep.subr.mxu0 0.0
      %1217 = vmatpush1.msra.mxu0 0.0
      %1218 = vmatprep.subr.mxu0 0.0
      %1219 = vmatpush1.msra.mxu0 0.0
      %1220 = vmatprep.subr.mxu0 0.0
      %1221 = vmatpush1.msra.mxu0 %v1188
      %1222 = vmatprep.subr.mxu0 0.0
      %1223 = vmatpush2.msra.mxu0 0.0
      %1224 = vmatprep.subr.mxu0 0.0
      %1225 = vmatpush2.msra.mxu0 0.0
      %1226 = vmatprep.subr.mxu0 0.0
      %1227 = vmatpush2.msra.mxu0 0.0
      %1228 = vmatprep.subr.mxu0 0.0
      %1229 = vmatpush2.msra.mxu0 0.0
      %1230 = vmatprep.subr.mxu0 0.0
      %1231 = vmatpush2.msra.mxu0 0.0
      %1232 = vmatprep.subr.mxu0 0.0
      %1233 = vmatpush2.msra.mxu0 0.0
      %1234 = vmatprep.subr.mxu0 0.0
      %1235 = vmatpush2.msra.mxu0 0.0
      %1236 = vmatprep.subr.mxu0 0.0
      %1237 = vmatpush2.msra.mxu0 0.0
      %1238 = vmatprep.subr.mxu0 0.0
      %1239 = vmatpush2.msra.mxu0 0.0
      %1240 = vmatprep.subr.mxu0 0.0
      %1241 = vmatpush2.msra.mxu0 0.0
      %1242 = vmatprep.subr.mxu0 0.0
      %1243 = vmatpush2.msra.mxu0 0.0
      %1244 = vmatprep.subr.mxu0 0.0
      %1245 = vmatpush2.msra.mxu0 0.0
      %1246 = vmatprep.subr.mxu0 0.0
      %1247 = vmatpush2.msra.mxu0 0.0
      %1248 = vmatprep.subr.mxu0 0.0
      %1249 = vmatpush2.msra.mxu0 0.0
      %1250 = vmatprep.subr.mxu0 0.0
      %1251 = vmatpush2.msra.mxu0 0.0
      %1252 = vmatprep.subr.mxu0 0.0
      %1253 = vmatpush2.msra.mxu0 0.0
      %1254 = vmatprep.mubr.f32.mxu0 0.0
      %1255 = vmatmul.mubr.f32.gmra.mxu0 %v1164
      %v1256 = vpop.f32.mrf.mxu0
      %v1257 = vadd.f32 0.0, %v1256
      %v1258 = vpop.f32.mrf.mxu0
      %1259 = vmatprep.mubr.f32.mxu0 0.0
      %1260 = vmatmul.mubr.f32.gmra.mxu0 %v1167
      %v1261 = vpop.f32.mrf.mxu0
      %v1262 = vadd.f32 0.0, %v1261
      %v1263 = vpop.f32.mrf.mxu0
      %1264 = vmatprep.mubr.f32.mxu0 0.0
      %1265 = vmatmul.mubr.f32.gmra.mxu0 %v1170
      %v1266 = vpop.f32.mrf.mxu0
      %v1267 = vadd.f32 0.0, %v1266
      %v1268 = vpop.f32.mrf.mxu0
      %1269 = vmatprep.mubr.f32.mxu0 0.0
      %1270 = vmatmul.mubr.f32.gmra.mxu0 %v1173
      %v1271 = vpop.f32.mrf.mxu0
      %v1272 = vadd.f32 0.0, %v1271
      %v1273 = vpop.f32.mrf.mxu0
      %1274 = vmatprep.mubr.f32.mxu0 0.0
      %1275 = vmatmul.mubr.f32.gmra.mxu0 %v1176
      %v1276 = vpop.f32.mrf.mxu0
      %v1277 = vadd.f32 0.0, %v1276
      %v1278 = vpop.f32.mrf.mxu0
      %1279 = vmatprep.mubr.f32.mxu0 0.0
      %1280 = vmatmul.mubr.f32.gmra.mxu0 %v1179
      %v1281 = vpop.f32.mrf.mxu0
      %v1282 = vadd.f32 0.0, %v1281
      %v1283 = vpop.f32.mrf.mxu0
      %1284 = vmatprep.mubr.f32.mxu0 0.0
      %1285 = vmatmul.mubr.f32.gmra.mxu0 %v1182
      %v1286 = vpop.f32.mrf.mxu0
      %v1287 = vadd.f32 0.0, %v1286
      %v1288 = vpop.f32.mrf.mxu0
      %1289 = vmatprep.mubr.f32.mxu0 0.0
      %1290 = vmatmul.mubr.f32.gmra.mxu0 %v1185
      %v1291 = vpop.f32.mrf.mxu0
      %v1292 = vadd.f32 0.0, %v1291
      %v1293 = vpop.f32.mrf.mxu0
      %1294 = vdwg.mxu0
      %v1295 = vadd.f32 %v1144, %v1257
      %v1296 = vadd.f32 %v1145, %v1262
      %v1297 = vadd.f32 %v1146, %v1267
      %v1298 = vadd.f32 %v1147, %v1272
      %v1299 = vadd.f32 %v1148, %v1277
      %v1300 = vadd.f32 %v1149, %v1282
      %v1301 = vadd.f32 %v1150, %v1287
      %v1302 = vadd.f32 %v1151, %v1292
      %s1303 = scalar_lea.vmem %s232, 160
      %v1304 = vld [vmem:[%s1303] sm:$0xff]
      %v1305 = vld [vmem:[%s1303 + $0x10] sm:$0xff]
      %v1306 = vld [vmem:[%s1303 + $0x20] sm:$0xff]
      %v1307 = vld [vmem:[%s1303 + $0x30] sm:$0xff]
      %v1308 = vld [vmem:[%s1303 + $0x40] sm:$0xff]
      %v1309 = vld [vmem:[%s1303 + $0x50] sm:$0xff]
      %v1310 = vld [vmem:[%s1303 + $0x60] sm:$0xff]
      %v1311 = vld [vmem:[%s1303 + $0x70] sm:$0xff]
      %s1312 = scalar_lea.vmem %s239, 28
      %v1313 = vld [vmem:[%s1312] sm:$0xf]
      %v1315 = vsel %vm284, %v1304, 0
      %v1318 = vsel %vm284, %v1305, 0
      %v1321 = vsel %vm284, %v1306, 0
      %v1324 = vsel %vm284, %v1307, 0
      %v1327 = vsel %vm284, %v1308, 0
      %v1330 = vsel %vm284, %v1309, 0
      %v1333 = vsel %vm284, %v1310, 0
      %v1336 = vsel %vm284, %v1311, 0
      %v1339 = vsel %vm309, %v1313, 0
      %1341 = vmatprep.subr.mxu0 0.0
      %1342 = vmatpush1.msra.mxu0 0.0
      %1343 = vmatprep.subr.mxu0 0.0
      %1344 = vmatpush1.msra.mxu0 0.0
      %1345 = vmatprep.subr.mxu0 0.0
      %1346 = vmatpush1.msra.mxu0 0.0
      %1347 = vmatprep.subr.mxu0 0.0
      %1348 = vmatpush1.msra.mxu0 0.0
      %1349 = vmatprep.subr.mxu0 0.0
      %1350 = vmatpush1.msra.mxu0 0.0
      %1351 = vmatprep.subr.mxu0 0.0
      %1352 = vmatpush1.msra.mxu0 0.0
      %1353 = vmatprep.subr.mxu0 0.0
      %1354 = vmatpush1.msra.mxu0 0.0
      %1355 = vmatprep.subr.mxu0 0.0
      %1356 = vmatpush1.msra.mxu0 0.0
      %1357 = vmatprep.subr.mxu0 0.0
      %1358 = vmatpush1.msra.mxu0 0.0
      %1359 = vmatprep.subr.mxu0 0.0
      %1360 = vmatpush1.msra.mxu0 0.0
      %1361 = vmatprep.subr.mxu0 0.0
      %1362 = vmatpush1.msra.mxu0 0.0
      %1363 = vmatprep.subr.mxu0 0.0
      %1364 = vmatpush1.msra.mxu0 0.0
      %1365 = vmatprep.subr.mxu0 0.0
      %1366 = vmatpush1.msra.mxu0 0.0
      %1367 = vmatprep.subr.mxu0 0.0
      %1368 = vmatpush1.msra.mxu0 0.0
      %1369 = vmatprep.subr.mxu0 0.0
      %1370 = vmatpush1.msra.mxu0 0.0
      %1371 = vmatprep.subr.mxu0 0.0
      %1372 = vmatpush1.msra.mxu0 %v1339
      %1373 = vmatprep.subr.mxu0 0.0
      %1374 = vmatpush2.msra.mxu0 0.0
      %1375 = vmatprep.subr.mxu0 0.0
      %1376 = vmatpush2.msra.mxu0 0.0
      %1377 = vmatprep.subr.mxu0 0.0
      %1378 = vmatpush2.msra.mxu0 0.0
      %1379 = vmatprep.subr.mxu0 0.0
      %1380 = vmatpush2.msra.mxu0 0.0
      %1381 = vmatprep.subr.mxu0 0.0
      %1382 = vmatpush2.msra.mxu0 0.0
      %1383 = vmatprep.subr.mxu0 0.0
      %1384 = vmatpush2.msra.mxu0 0.0
      %1385 = vmatprep.subr.mxu0 0.0
      %1386 = vmatpush2.msra.mxu0 0.0
      %1387 = vmatprep.subr.mxu0 0.0
      %1388 = vmatpush2.msra.mxu0 0.0
      %1389 = vmatprep.subr.mxu0 0.0
      %1390 = vmatpush2.msra.mxu0 0.0
      %1391 = vmatprep.subr.mxu0 0.0
      %1392 = vmatpush2.msra.mxu0 0.0
      %1393 = vmatprep.subr.mxu0 0.0
      %1394 = vmatpush2.msra.mxu0 0.0
      %1395 = vmatprep.subr.mxu0 0.0
      %1396 = vmatpush2.msra.mxu0 0.0
      %1397 = vmatprep.subr.mxu0 0.0
      %1398 = vmatpush2.msra.mxu0 0.0
      %1399 = vmatprep.subr.mxu0 0.0
      %1400 = vmatpush2.msra.mxu0 0.0
      %1401 = vmatprep.subr.mxu0 0.0
      %1402 = vmatpush2.msra.mxu0 0.0
      %1403 = vmatprep.subr.mxu0 0.0
      %1404 = vmatpush2.msra.mxu0 0.0
      %1405 = vmatprep.mubr.f32.mxu0 0.0
      %1406 = vmatmul.mubr.f32.gmra.mxu0 %v1315
      %v1407 = vpop.f32.mrf.mxu0
      %v1408 = vadd.f32 0.0, %v1407
      %v1409 = vpop.f32.mrf.mxu0
      %1410 = vmatprep.mubr.f32.mxu0 0.0
      %1411 = vmatmul.mubr.f32.gmra.mxu0 %v1318
      %v1412 = vpop.f32.mrf.mxu0
      %v1413 = vadd.f32 0.0, %v1412
      %v1414 = vpop.f32.mrf.mxu0
      %1415 = vmatprep.mubr.f32.mxu0 0.0
      %1416 = vmatmul.mubr.f32.gmra.mxu0 %v1321
      %v1417 = vpop.f32.mrf.mxu0
      %v1418 = vadd.f32 0.0, %v1417
      %v1419 = vpop.f32.mrf.mxu0
      %1420 = vmatprep.mubr.f32.mxu0 0.0
      %1421 = vmatmul.mubr.f32.gmra.mxu0 %v1324
      %v1422 = vpop.f32.mrf.mxu0
      %v1423 = vadd.f32 0.0, %v1422
      %v1424 = vpop.f32.mrf.mxu0
      %1425 = vmatprep.mubr.f32.mxu0 0.0
      %1426 = vmatmul.mubr.f32.gmra.mxu0 %v1327
      %v1427 = vpop.f32.mrf.mxu0
      %v1428 = vadd.f32 0.0, %v1427
      %v1429 = vpop.f32.mrf.mxu0
      %1430 = vmatprep.mubr.f32.mxu0 0.0
      %1431 = vmatmul.mubr.f32.gmra.mxu0 %v1330
      %v1432 = vpop.f32.mrf.mxu0
      %v1433 = vadd.f32 0.0, %v1432
      %v1434 = vpop.f32.mrf.mxu0
      %1435 = vmatprep.mubr.f32.mxu0 0.0
      %1436 = vmatmul.mubr.f32.gmra.mxu0 %v1333
      %v1437 = vpop.f32.mrf.mxu0
      %v1438 = vadd.f32 0.0, %v1437
      %v1439 = vpop.f32.mrf.mxu0
      %1440 = vmatprep.mubr.f32.mxu0 0.0
      %1441 = vmatmul.mubr.f32.gmra.mxu0 %v1336
      %v1442 = vpop.f32.mrf.mxu0
      %v1443 = vadd.f32 0.0, %v1442
      %v1444 = vpop.f32.mrf.mxu0
      %1445 = vdwg.mxu0
      %v1446 = vadd.f32 %v1295, %v1408
      %v1447 = vadd.f32 %v1296, %v1413
      %v1448 = vadd.f32 %v1297, %v1418
      %v1449 = vadd.f32 %v1298, %v1423
      %v1450 = vadd.f32 %v1299, %v1428
      %v1451 = vadd.f32 %v1300, %v1433
      %v1452 = vadd.f32 %v1301, %v1438
      %v1453 = vadd.f32 %v1302, %v1443
      %v1454 = vld [vmem:[%s1152 + $0x1] sm:$0xff]
      %v1455 = vld [vmem:[%s1152 + $0x11] sm:$0xff]
      %v1456 = vld [vmem:[%s1152 + $0x21] sm:$0xff]
      %v1457 = vld [vmem:[%s1152 + $0x31] sm:$0xff]
      %v1458 = vld [vmem:[%s1152 + $0x41] sm:$0xff]
      %v1459 = vld [vmem:[%s1152 + $0x51] sm:$0xff]
      %v1460 = vld [vmem:[%s1152 + $0x61] sm:$0xff]
      %v1461 = vld [vmem:[%s1152 + $0x71] sm:$0xff]
      %s1462 = scalar_lea.vmem %s239, 32
      %v1463 = vld [vmem:[%s1462] sm:$0xf]
      %v1465 = vsel %vm284, %v1454, 0
      %v1468 = vsel %vm284, %v1455, 0
      %v1471 = vsel %vm284, %v1456, 0
      %v1474 = vsel %vm284, %v1457, 0
      %v1477 = vsel %vm284, %v1458, 0
      %v1480 = vsel %vm284, %v1459, 0
      %v1483 = vsel %vm284, %v1460, 0
      %v1486 = vsel %vm284, %v1461, 0
      %v1489 = vsel %vm309, %v1463, 0
      %1491 = vmatprep.subr.mxu0 0.0
      %1492 = vmatpush1.msra.mxu0 0.0
      %1493 = vmatprep.subr.mxu0 0.0
      %1494 = vmatpush1.msra.mxu0 0.0
      %1495 = vmatprep.subr.mxu0 0.0
      %1496 = vmatpush1.msra.mxu0 0.0
      %1497 = vmatprep.subr.mxu0 0.0
      %1498 = vmatpush1.msra.mxu0 0.0
      %1499 = vmatprep.subr.mxu0 0.0
      %1500 = vmatpush1.msra.mxu0 0.0
      %1501 = vmatprep.subr.mxu0 0.0
      %1502 = vmatpush1.msra.mxu0 0.0
      %1503 = vmatprep.subr.mxu0 0.0
      %1504 = vmatpush1.msra.mxu0 0.0
      %1505 = vmatprep.subr.mxu0 0.0
      %1506 = vmatpush1.msra.mxu0 0.0
      %1507 = vmatprep.subr.mxu0 0.0
      %1508 = vmatpush1.msra.mxu0 0.0
      %1509 = vmatprep.subr.mxu0 0.0
      %1510 = vmatpush1.msra.mxu0 0.0
      %1511 = vmatprep.subr.mxu0 0.0
      %1512 = vmatpush1.msra.mxu0 0.0
      %1513 = vmatprep.subr.mxu0 0.0
      %1514 = vmatpush1.msra.mxu0 0.0
      %1515 = vmatprep.subr.mxu0 0.0
      %1516 = vmatpush1.msra.mxu0 0.0
      %1517 = vmatprep.subr.mxu0 0.0
      %1518 = vmatpush1.msra.mxu0 0.0
      %1519 = vmatprep.subr.mxu0 0.0
      %1520 = vmatpush1.msra.mxu0 0.0
      %1521 = vmatprep.subr.mxu0 0.0
      %1522 = vmatpush1.msra.mxu0 %v1489
      %1523 = vmatprep.subr.mxu0 0.0
      %1524 = vmatpush2.msra.mxu0 0.0
      %1525 = vmatprep.subr.mxu0 0.0
      %1526 = vmatpush2.msra.mxu0 0.0
      %1527 = vmatprep.subr.mxu0 0.0
      %1528 = vmatpush2.msra.mxu0 0.0
      %1529 = vmatprep.subr.mxu0 0.0
      %1530 = vmatpush2.msra.mxu0 0.0
      %1531 = vmatprep.subr.mxu0 0.0
      %1532 = vmatpush2.msra.mxu0 0.0
      %1533 = vmatprep.subr.mxu0 0.0
      %1534 = vmatpush2.msra.mxu0 0.0
      %1535 = vmatprep.subr.mxu0 0.0
      %1536 = vmatpush2.msra.mxu0 0.0
      %1537 = vmatprep.subr.mxu0 0.0
      %1538 = vmatpush2.msra.mxu0 0.0
      %1539 = vmatprep.subr.mxu0 0.0
      %1540 = vmatpush2.msra.mxu0 0.0
      %1541 = vmatprep.subr.mxu0 0.0
      %1542 = vmatpush2.msra.mxu0 0.0
      %1543 = vmatprep.subr.mxu0 0.0
      %1544 = vmatpush2.msra.mxu0 0.0
      %1545 = vmatprep.subr.mxu0 0.0
      %1546 = vmatpush2.msra.mxu0 0.0
      %1547 = vmatprep.subr.mxu0 0.0
      %1548 = vmatpush2.msra.mxu0 0.0
      %1549 = vmatprep.subr.mxu0 0.0
      %1550 = vmatpush2.msra.mxu0 0.0
      %1551 = vmatprep.subr.mxu0 0.0
      %1552 = vmatpush2.msra.mxu0 0.0
      %1553 = vmatprep.subr.mxu0 0.0
      %1554 = vmatpush2.msra.mxu0 0.0
      %1555 = vmatprep.mubr.f32.mxu0 0.0
      %1556 = vmatmul.mubr.f32.gmra.mxu0 %v1465
      %v1557 = vpop.f32.mrf.mxu0
      %v1558 = vadd.f32 0.0, %v1557
      %v1559 = vpop.f32.mrf.mxu0
      %1560 = vmatprep.mubr.f32.mxu0 0.0
      %1561 = vmatmul.mubr.f32.gmra.mxu0 %v1468
      %v1562 = vpop.f32.mrf.mxu0
      %v1563 = vadd.f32 0.0, %v1562
      %v1564 = vpop.f32.mrf.mxu0
      %1565 = vmatprep.mubr.f32.mxu0 0.0
      %1566 = vmatmul.mubr.f32.gmra.mxu0 %v1471
      %v1567 = vpop.f32.mrf.mxu0
      %v1568 = vadd.f32 0.0, %v1567
      %v1569 = vpop.f32.mrf.mxu0
      %1570 = vmatprep.mubr.f32.mxu0 0.0
      %1571 = vmatmul.mubr.f32.gmra.mxu0 %v1474
      %v1572 = vpop.f32.mrf.mxu0
      %v1573 = vadd.f32 0.0, %v1572
      %v1574 = vpop.f32.mrf.mxu0
      %1575 = vmatprep.mubr.f32.mxu0 0.0
      %1576 = vmatmul.mubr.f32.gmra.mxu0 %v1477
      %v1577 = vpop.f32.mrf.mxu0
      %v1578 = vadd.f32 0.0, %v1577
      %v1579 = vpop.f32.mrf.mxu0
      %1580 = vmatprep.mubr.f32.mxu0 0.0
      %1581 = vmatmul.mubr.f32.gmra.mxu0 %v1480
      %v1582 = vpop.f32.mrf.mxu0
      %v1583 = vadd.f32 0.0, %v1582
      %v1584 = vpop.f32.mrf.mxu0
      %1585 = vmatprep.mubr.f32.mxu0 0.0
      %1586 = vmatmul.mubr.f32.gmra.mxu0 %v1483
      %v1587 = vpop.f32.mrf.mxu0
      %v1588 = vadd.f32 0.0, %v1587
      %v1589 = vpop.f32.mrf.mxu0
      %1590 = vmatprep.mubr.f32.mxu0 0.0
      %1591 = vmatmul.mubr.f32.gmra.mxu0 %v1486
      %v1592 = vpop.f32.mrf.mxu0
      %v1593 = vadd.f32 0.0, %v1592
      %v1594 = vpop.f32.mrf.mxu0
      %1595 = vdwg.mxu0
      %v1596 = vadd.f32 %v1446, %v1558
      %v1597 = vadd.f32 %v1447, %v1563
      %v1598 = vadd.f32 %v1448, %v1568
      %v1599 = vadd.f32 %v1449, %v1573
      %v1600 = vadd.f32 %v1450, %v1578
      %v1601 = vadd.f32 %v1451, %v1583
      %v1602 = vadd.f32 %v1452, %v1588
      %v1603 = vadd.f32 %v1453, %v1593
      %v1604 = vld [vmem:[#allocation2] sm:$0xff]
      %v1605 = vld [vmem:[#allocation2 + $0x8] sm:$0xff]
      %v1606 = vld [vmem:[#allocation2 + $0x10] sm:$0xff]
      %v1607 = vld [vmem:[#allocation2 + $0x18] sm:$0xff]
      %v1608 = vld [vmem:[#allocation2 + $0x20] sm:$0xff]
      %v1609 = vld [vmem:[#allocation2 + $0x28] sm:$0xff]
      %v1610 = vld [vmem:[#allocation2 + $0x30] sm:$0xff]
      %v1611 = vld [vmem:[#allocation2 + $0x38] sm:$0xff]
      %v1612 = vadd.f32 %v1604, %v1596
      %v1613 = vadd.f32 %v1605, %v1597
      %v1614 = vadd.f32 %v1606, %v1598
      %v1615 = vadd.f32 %v1607, %v1599
      %v1616 = vadd.f32 %v1608, %v1600
      %v1617 = vadd.f32 %v1609, %v1601
      %v1618 = vadd.f32 %v1610, %v1602
      %v1619 = vadd.f32 %v1611, %v1603
      %vm1620 = vcmask 64512
      %1621 = vst.msk [vmem:[#allocation2] sm:$0xff] %vm1620, %v1612
      %1622 = vst.msk [vmem:[#allocation2 + $0x8] sm:$0xff] %vm1620, %v1613
      %1623 = vst.msk [vmem:[#allocation2 + $0x10] sm:$0xff] %vm1620, %v1614
      %1624 = vst.msk [vmem:[#allocation2 + $0x18] sm:$0xff] %vm1620, %v1615
      %1625 = vst.msk [vmem:[#allocation2 + $0x20] sm:$0xff] %vm1620, %v1616
      %1626 = vst.msk [vmem:[#allocation2 + $0x28] sm:$0xff] %vm1620, %v1617
      %1627 = vst.msk [vmem:[#allocation2 + $0x30] sm:$0xff] %vm1620, %v1618
      %1628 = vst.msk [vmem:[#allocation2 + $0x38] sm:$0xff] %vm1620, %v1619
      // Predicated region
      $region37: #{tpu_custom_call.1} parent=31 // pred_check
        %p1629 = pneg %p251
      $region38: #{tpu_custom_call.1} parent=31 // pred_check_branch
        %1631 = sbr.rel (%p1629) target = $region40
      $region39: #{tpu_custom_call.1} parent=31 // pred_region
        %v1632 = vld [vmem:[#allocation2] sm:$0xff]
        %v1633 = vld [vmem:[#allocation2 + $0x8] sm:$0xff]
        %v1634 = vld [vmem:[#allocation2 + $0x10] sm:$0xff]
        %v1635 = vld [vmem:[#allocation2 + $0x18] sm:$0xff]
        %v1636 = vld [vmem:[#allocation2 + $0x20] sm:$0xff]
        %v1637 = vld [vmem:[#allocation2 + $0x28] sm:$0xff]
        %v1638 = vld [vmem:[#allocation2 + $0x30] sm:$0xff]
        %v1639 = vld [vmem:[#allocation2 + $0x38] sm:$0xff]
        %v1640 = vld [vmem:[%s242] sm:$0x1]
        %v1642 = vlaneseq
        %v1643 = vshrl.u32 %v1642, 7
        %v1644 = vsub.s32 0, %v1643
        %v1645 = vrot.slane %v1640, %v1644
        %v1647 = vadd.f32 %v1632, %v1645
        %v1648 = vadd.f32 %v1633, %v1645
        %v1649 = vadd.f32 %v1634, %v1645
        %v1650 = vadd.f32 %v1635, %v1645
        %v1651 = vadd.f32 %v1636, %v1645
        %v1652 = vadd.f32 %v1637, %v1645
        %v1653 = vadd.f32 %v1638, %v1645
        %v1654 = vadd.f32 %v1639, %v1645
        %1655 = vst.msk [vmem:[%s250] sm:$0xff] %vm1620, %v1647
        %1656 = vst.msk [vmem:[%s250 + $0x8] sm:$0xff] %vm1620, %v1648
        %1657 = vst.msk [vmem:[%s250 + $0x10] sm:$0xff] %vm1620, %v1649
        %1658 = vst.msk [vmem:[%s250 + $0x18] sm:$0xff] %vm1620, %v1650
        %1659 = vst.msk [vmem:[%s250 + $0x20] sm:$0xff] %vm1620, %v1651
        %1660 = vst.msk [vmem:[%s250 + $0x28] sm:$0xff] %vm1620, %v1652
        %1661 = vst.msk [vmem:[%s250 + $0x30] sm:$0xff] %vm1620, %v1653
        %1662 = vst.msk [vmem:[%s250 + $0x38] sm:$0xff] %vm1620, %v1654
      $region40: #{tpu_custom_call.1} parent=31 // pred_fallthru
        _
      %p1663 = scmp.lt.s32.totalorder %s19, 1
      %s1664 = scalar_select %p1663, %s19, 1
      %p1665 = scmp.lt.s32.totalorder %s20, 0
      %s1666 = scalar_select %p1665, %s20, 0
      %s1667 = smul.addr %s1664, 8
      %s1668 = sadd.s32 %s1666, %s1667
      %s1669 = smul.addr %s1668, 8
      %s1670 = scalar_lea.vmem %s3, %s1669
      // Predicated region
      $region41: #{tpu_custom_call.1} parent=31 // pred_check
        %p1671 = pneg %p135
      $region42: #{tpu_custom_call.1} parent=31 // pred_check_branch
        %1673 = sbr.rel (%p1671) target = $region44
      $region43: #{tpu_custom_call.1} parent=31 // pred_region
        _
      $region44: #{tpu_custom_call.1} parent=31 // pred_fallthru
        _
    $region32: #{tpu_custom_call.1} parent=5 // pred_fallthru
      _
    %p1674 = scmp.le.s32.totalorder 2, %s9
    // Predicated region
    $region45: #{tpu_custom_call.1} parent=5 // pred_check
      %p1675 = pneg %p1674
    $region46: #{tpu_custom_call.1} parent=5 // pred_check_branch
      %1677 = sbr.rel (%p1675) target = $region48
    $region47: #{tpu_custom_call.1} parent=5 // pred_region
      %s1678 = ssub.s32 %s9, 2
      // Predicated region
      $region49: #{tpu_custom_call.1} parent=47 // pred_check
        %p1679 = pneg %p141
      $region50: #{tpu_custom_call.1} parent=47 // pred_check_branch
        %1681 = sbr.rel (%p1679) target = $region52
      $region51: #{tpu_custom_call.1} parent=47 // pred_region
        %p1682 = scmp.lt.s32.totalorder %s22, 1
        %s1683 = scalar_select %p1682, %s22, 1
        %p1684 = scmp.lt.s32.totalorder %s23, 0
        %s1685 = scalar_select %p1684, %s23, 0
        %s1686 = smul.addr %s1683, 8
        %s1687 = sadd.s32 %s1685, %s1686
        %s1688 = smul.addr %s1687, 8
        %s1689 = scalar_lea.vmem %s3, %s1688
      $region52: #{tpu_custom_call.1} parent=47 // pred_fallthru
        _
    $region48: #{tpu_custom_call.1} parent=5 // pred_fallthru
      _
  $region6: #{tpu_custom_call.1} parent=0 // loop_footer
    %s13 = sadd.s32 1, %s9
  $region7: #{tpu_custom_call.1} parent=0 // loop_footer_branch
    %8 = sbr.rel target = $region3
  $region8: #{tpu_custom_call.1} parent=0 // loop_exit
    _

</llo_original>
